<compile_context>
chip_gen: v5e
topology: v5e:2x2
jax: 0.10.0
libtpu: 0.0.40
codegen_flags: <defaults>
</compile_context>

<pallas_src>
import random

import jax
import jax.numpy as jnp
from jax.experimental import pallas as pl
from jax.experimental.pallas import tpu as pltpu


# ----------------------------- kernel helpers ---------------------------------


def _lstm_cell(x, h, c, w_ref, b_ref, hidden):
    """Merged-matmul LSTM cell on in-VMEM values: gates = [x|h] @ [W_ih;W_hh] + b."""
    xh = jnp.concatenate([x, h], axis=-1)                       # (B, E+H)
    gates = jnp.dot(xh, w_ref[...], preferred_element_type=jnp.float32) + b_ref[...]
    i = jax.nn.sigmoid(gates[:, 0 * hidden:1 * hidden])
    f = jax.nn.sigmoid(gates[:, 1 * hidden:2 * hidden])
    g = jnp.tanh(gates[:, 2 * hidden:3 * hidden])
    o = jax.nn.sigmoid(gates[:, 3 * hidden:4 * hidden])
    c_new = f * c + i * g
    h_new = o * jnp.tanh(c_new)
    return h_new, c_new


# ----------------------------- fused seq2seq kernel ----------------------------


def make_seq2seq_kernel(n_enc):
    """Returns the fused kernel; steps [0, n_enc) = encoder, [n_enc, ...) = decoder."""

    def kernel(tf_ref,                          # SMEM scalar-prefetch: (T-1,) int32 flags
               src_emb_ref, tgt_emb_ref,        # (1, B, E) per-step embeddings
               enc_w_ref, enc_b_ref,            # (E+H, 4H), (1, 4H)
               dec_w_ref, dec_b_ref,            # (E+H, 4H), (1, 4H)
               wfc_ref, bfc_ref,                # (H, V), (1, V)
               dec_emb_ref,                     # (V, E) decoder embedding (resident)
               out_ref,                         # (1, B, V) logits block
               h_sc, c_sc, x_sc):               # VMEM carried state
        t = pl.program_id(0)
        hidden = h_sc.shape[-1]

        @pl.when(t == 0)
        def _():
            h_sc[...] = jnp.zeros_like(h_sc)
            c_sc[...] = jnp.zeros_like(c_sc)
            # Output block 0 stays at grid index 0 for the whole encoder phase and is
            # written back (as zeros) when the decoder starts -> outputs[0] == 0.
            out_ref[...] = jnp.zeros(out_ref.shape, out_ref.dtype)

        # ------------------------- encoder phase -------------------------
        @pl.when(t < n_enc)
        def _():
            h_new, c_new = _lstm_cell(src_emb_ref[0], h_sc[...], c_sc[...],
                                      enc_w_ref, enc_b_ref, hidden)
            h_sc[...] = h_new
            c_sc[...] = c_new

        # ------------------------- decoder phase -------------------------
        @pl.when(t >= n_enc)
        def _():
            s = t - n_enc
            # Step 0 always uses target[0]; step s>0 uses target[s] if the coin flip
            # drawn after step s-1 said "teacher force", otherwise the greedy-argmax
            # embedding already sitting in x_sc from the previous step.
            prev_flag = tf_ref[jnp.maximum(s - 1, 0)]
            use_tf = jnp.logical_or(s == 0, prev_flag == 1)

            @pl.when(use_tf)
            def _():
                x_sc[...] = tgt_emb_ref[0]

            h_new, c_new = _lstm_cell(x_sc[...], h_sc[...], c_sc[...],
                                      dec_w_ref, dec_b_ref, hidden)
            h_sc[...] = h_new
            c_sc[...] = c_new

            logits = (jnp.dot(h_new, wfc_ref[...], preferred_element_type=jnp.float32)
                      + bfc_ref[...])
            out_ref[0] = logits                                  # lane-dense (B, V) store

            # Greedy feedback, fully on-chip: first-argmax as one-hot, embed via MXU.
            vocab = logits.shape[-1]
            idx = jax.lax.broadcasted_iota(jnp.int32, logits.shape, dimension=1)
            max_val = jnp.max(logits, axis=-1, keepdims=True)
            cand = jnp.where(logits == max_val, idx, jnp.int32(vocab))
            best = jnp.min(cand, axis=-1, keepdims=True)         # first max index (B, 1)
            onehot = (idx == best).astype(jnp.float32)           # (B, V)
            x_sc[...] = jnp.dot(onehot, dec_emb_ref[...],
                                preferred_element_type=jnp.float32)

    return kernel


def run_seq2seq(tf_flags, src_emb, tgt_emb, params):
    S, B, E = src_emb.shape
    T = tgt_emb.shape[0]
    H = params["enc_w"].shape[-1] // 4
    V = params["dec_wfc"].shape[-1]
    steps = S + (T - 1)

    grid_spec = pltpu.PrefetchScalarGridSpec(
        num_scalar_prefetch=1,
        grid=(steps,),
        in_specs=[
            # per-step source embedding (held at S-1 during decoder phase -> no re-DMA)
            pl.BlockSpec((1, B, E), lambda t, tf: (jnp.minimum(t, S - 1), 0, 0)),
            # per-step teacher-forcing target embedding (0 during encoder phase)
            pl.BlockSpec((1, B, E), lambda t, tf: (jnp.maximum(t - S, 0), 0, 0)),
            # resident weights / biases / embedding table
            pl.BlockSpec(params["enc_w"].shape, lambda t, tf: (0, 0)),
            pl.BlockSpec(params["enc_b"].shape, lambda t, tf: (0, 0)),
            pl.BlockSpec(params["dec_w"].shape, lambda t, tf: (0, 0)),
            pl.BlockSpec(params["dec_b"].shape, lambda t, tf: (0, 0)),
            pl.BlockSpec(params["dec_wfc"].shape, lambda t, tf: (0, 0)),
            pl.BlockSpec(params["dec_bfc"].shape, lambda t, tf: (0, 0)),
            pl.BlockSpec(params["dec_emb"].shape, lambda t, tf: (0, 0)),
        ],
        # block 0 (zeros) for the whole encoder phase, then block s+1 per decoder step
        out_specs=pl.BlockSpec((1, B, V),
                               lambda t, tf: (jnp.maximum(t - S + 1, 0), 0, 0)),
        scratch_shapes=[pltpu.VMEM((B, H), jnp.float32),    # h
                        pltpu.VMEM((B, H), jnp.float32),    # c
                        pltpu.VMEM((B, E), jnp.float32)],   # decoder input x
    )
    return pl.pallas_call(
        make_seq2seq_kernel(S),
        out_shape=jax.ShapeDtypeStruct((T, B, V), jnp.float32),
        grid_spec=grid_spec,
        compiler_params=pltpu.CompilerParams(dimension_semantics=("arbitrary",)),
    )(tf_flags, src_emb, tgt_emb,
      params["enc_w"], params["enc_b"],
      params["dec_w"], params["dec_b"],
      params["dec_wfc"], params["dec_bfc"], params["dec_emb"])


# ----------------------------- Seq2Seq forward ---------------------------------


@jax.jit
def seq2seq_forward(params, source, target, tf_flags):
    """Mirrors Seq2Seq.forward: returns (target_len, batch, vocab); outputs[0] = 0."""
    src_emb = params["enc_emb"][source]                            # (S, B, E) one gather
    tgt_emb = params["dec_emb"][target]                            # (T, B, E) one gather
    return run_seq2seq(tf_flags, src_emb, tgt_emb, params)         # (T, B, V)


# ----------------------------- parameter init ----------------------------------


def init_params(key, vocab, emb, hidden):
    ks = jax.random.split(key, 8)
    s_in = 1.0 / jnp.sqrt(jnp.float32(hidden))

    def nrm(k, shape, scale):
        return (scale * jax.random.normal(k, shape)).astype(jnp.float32)

    # TODO(synk): bf16 weights with f32 accumulation once vocab/hidden reach realistic
    # sizes; at 128-wide demo shapes f32 keeps numerics identical to the reference.
    return {
        # Encoder: embedding + single-layer LSTM (merged [W_ih; W_hh], combined bias)
        "enc_emb": nrm(ks[0], (vocab, emb), 0.1),
        "enc_w":   nrm(ks[1], (emb + hidden, 4 * hidden), s_in),
        "enc_b":   nrm(ks[2], (1, 4 * hidden), s_in),
        # Decoder: embedding + single-layer LSTM + FC to vocab
        "dec_emb": nrm(ks[3], (vocab, emb), 0.1),
        "dec_w":   nrm(ks[4], (emb + hidden, 4 * hidden), s_in),
        "dec_b":   nrm(ks[5], (1, 4 * hidden), s_in),
        "dec_wfc": nrm(ks[6], (hidden, vocab), s_in),
        "dec_bfc": nrm(ks[7], (1, vocab), s_in),
    }


# ----------------------------- main ---------------------------------------------


if __name__ == "__main__":
    VOCAB = 128    # stand-in for len(ENGLISH.vocab); lane-aligned
    EMB = 128
    HIDDEN = 128
    BATCH = 8
    SRC_LEN = 8
    TGT_LEN = 8
    TFR = 0.5

    key = jax.random.PRNGKey(0)
    k_par, k_src, k_tgt = jax.random.split(key, 3)

    params = init_params(k_par, VOCAB, EMB, HIDDEN)
    source = jax.random.randint(k_src, (SRC_LEN, BATCH), 0, VOCAB, dtype=jnp.int32)
    target = jax.random.randint(k_tgt, (TGT_LEN, BATCH), 0, VOCAB, dtype=jnp.int32)

    # Deterministic, explicit teacher-forcing coin flips (jit-safe input instead of
    # trace-time random.random()); flags[k] = flip drawn after decode iteration k+1.
    rng = random.Random(1234)
    tf_flags = jnp.asarray(
        [1 if rng.random() < TFR else 0 for _ in range(TGT_LEN - 1)], dtype=jnp.int32)

    outputs = seq2seq_forward(params, source, target, tf_flags)
    outputs = jax.block_until_ready(outputs)

    assert outputs.shape == (TGT_LEN, BATCH, VOCAB)
    assert outputs.dtype == jnp.float32
    assert bool(jnp.all(outputs[0] == 0.0))            # outputs[0] never written
    assert bool(jnp.all(jnp.isfinite(outputs)))

    print("KERNEL_OK")
</pallas_src>

<mosaic_0001>
module attributes {stable_mosaic.version = 11 : i64} {
  func.func @kernel(%arg0: i32, %arg1: memref<7xi32, #tpu.memory_space<smem>>, %arg2: memref<1x8x128xf32, #tpu.memory_space<vmem>>, %arg3: memref<1x8x128xf32, #tpu.memory_space<vmem>>, %arg4: memref<256x512xf32, #tpu.memory_space<vmem>>, %arg5: memref<1x512xf32, #tpu.memory_space<vmem>>, %arg6: memref<256x512xf32, #tpu.memory_space<vmem>>, %arg7: memref<1x512xf32, #tpu.memory_space<vmem>>, %arg8: memref<128x128xf32, #tpu.memory_space<vmem>>, %arg9: memref<1x128xf32, #tpu.memory_space<vmem>>, %arg10: memref<128x128xf32, #tpu.memory_space<vmem>>, %arg11: memref<1x8x128xf32, #tpu.memory_space<vmem>>, %arg12: memref<8x128xf32, #tpu.memory_space<vmem>>, %arg13: memref<8x128xf32, #tpu.memory_space<vmem>>, %arg14: memref<8x128xf32, #tpu.memory_space<vmem>>) attributes {dimension_semantics = [#tpu.dimension_semantics<arbitrary>], iteration_bounds = array<i64: 15>, scalar_prefetch = 1 : i64, scratch_operands = 3 : i64, tpu.core_type = #tpu.core_type<tc>, window_params = [{transform_indices = @transform_0, window_bounds = array<i64: 1, 8, 128>}, {transform_indices = @transform_1, window_bounds = array<i64: 1, 8, 128>}, {pipeline_mode = #tpu.pipeline_mode<synchronous>, transform_indices = @transform_2, window_bounds = array<i64: 256, 512>}, {pipeline_mode = #tpu.pipeline_mode<synchronous>, transform_indices = @transform_3, window_bounds = array<i64: 1, 512>}, {pipeline_mode = #tpu.pipeline_mode<synchronous>, transform_indices = @transform_4, window_bounds = array<i64: 256, 512>}, {pipeline_mode = #tpu.pipeline_mode<synchronous>, transform_indices = @transform_5, window_bounds = array<i64: 1, 512>}, {pipeline_mode = #tpu.pipeline_mode<synchronous>, transform_indices = @transform_6, window_bounds = array<i64: 128, 128>}, {pipeline_mode = #tpu.pipeline_mode<synchronous>, transform_indices = @transform_7, window_bounds = array<i64: 1, 128>}, {pipeline_mode = #tpu.pipeline_mode<synchronous>, transform_indices = @transform_8, window_bounds = array<i64: 128, 128>}, {transform_indices = @transform_9, window_bounds = array<i64: 1, 8, 128>}]} {
    %c0_i32 = arith.constant 0 : i32
    %0 = arith.cmpi eq, %arg0, %c0_i32 : i32
    %1 = arith.extui %0 : i1 to i32
    %c0_i32_0 = arith.constant 0 : i32
    %2 = arith.cmpi ne, %1, %c0_i32_0 : i32
    scf.if %2 {
      %cst = arith.constant 0.000000e+00 : f32
      %9 = vector.broadcast %cst : f32 to vector<8x128xf32>
      %c0 = arith.constant 0 : index
      %c0_4 = arith.constant 0 : index
      %10 = vector.load %arg12[%c0, %c0_4] : memref<8x128xf32, #tpu.memory_space<vmem>>, vector<8x128xf32>
      tpu.vector_store %arg12[%c0, %c0_4], %9 {strides = array<i32>} : memref<8x128xf32, #tpu.memory_space<vmem>>, vector<8x128xf32>,
      %cst_5 = arith.constant 0.000000e+00 : f32
      %11 = vector.broadcast %cst_5 : f32 to vector<8x128xf32>
      %c0_6 = arith.constant 0 : index
      %c0_7 = arith.constant 0 : index
      %12 = vector.load %arg13[%c0_6, %c0_7] : memref<8x128xf32, #tpu.memory_space<vmem>>, vector<8x128xf32>
      tpu.vector_store %arg13[%c0_6, %c0_7], %11 {strides = array<i32>} : memref<8x128xf32, #tpu.memory_space<vmem>>, vector<8x128xf32>,
      %cst_8 = arith.constant 0.000000e+00 : f32
      %13 = vector.broadcast %cst_8 : f32 to vector<1x8x128xf32>
      %c0_9 = arith.constant 0 : index
      %c0_10 = arith.constant 0 : index
      %c0_11 = arith.constant 0 : index
      %14 = vector.load %arg11[%c0_9, %c0_10, %c0_11] : memref<1x8x128xf32, #tpu.memory_space<vmem>>, vector<1x8x128xf32>
      tpu.vector_store %arg11[%c0_9, %c0_10, %c0_11], %13 {strides = array<i32>} : memref<1x8x128xf32, #tpu.memory_space<vmem>>, vector<1x8x128xf32>,
    } else {
    }
    %c8_i32 = arith.constant 8 : i32
    %3 = arith.cmpi slt, %arg0, %c8_i32 : i32
    %4 = arith.extui %3 : i1 to i32
    %c0_i32_1 = arith.constant 0 : i32
    %5 = arith.cmpi ne, %4, %c0_i32_1 : i32
    scf.if %5 {
      %c0 = arith.constant 0 : index
      %c0_4 = arith.constant 0 : index
      %c0_5 = arith.constant 0 : index
      %9 = vector.load %arg2[%c0, %c0_4, %c0_5] : memref<1x8x128xf32, #tpu.memory_space<vmem>>, vector<1x8x128xf32>
      %10 = vector.shape_cast %9 : vector<1x8x128xf32> to vector<8x128xf32>
      %c0_6 = arith.constant 0 : index
      %c0_7 = arith.constant 0 : index
      %11 = vector.load %arg12[%c0_6, %c0_7] : memref<8x128xf32, #tpu.memory_space<vmem>>, vector<8x128xf32>
      %c0_8 = arith.constant 0 : index
      %c0_9 = arith.constant 0 : index
      %12 = vector.load %arg13[%c0_8, %c0_9] : memref<8x128xf32, #tpu.memory_space<vmem>>, vector<8x128xf32>
      %13 = tpu.concatenate %10, %11 in 1 : vector<8x128xf32>, vector<8x128xf32> -> vector<8x256xf32>
      %c0_10 = arith.constant 0 : index
      %c0_11 = arith.constant 0 : index
      %14 = vector.load %arg4[%c0_10, %c0_11] : memref<256x512xf32, #tpu.memory_space<vmem>>, vector<256x512xf32>
      %cst = arith.constant dense<0.000000e+00> : vector<8x512xf32>
      %15 = tpu.matmul %13, %14, %cst {dimension_numbers = #tpu.dot_dimension_numbers<[1], [0], [0], [1], [0, 0, 1, 1], [], []>} : vector<8x256xf32>, vector<256x512xf32>, vector<8x512xf32> -> vector<8x512xf32>
      %c0_12 = arith.constant 0 : index
      %c0_13 = arith.constant 0 : index
      %16 = vector.load %arg5[%c0_12, %c0_13] : memref<1x512xf32, #tpu.memory_space<vmem>>, vector<1x512xf32>
      %17 = vector.broadcast %16 : vector<1x512xf32> to vector<8x512xf32>
      %18 = arith.addf %15, %17 : vector<8x512xf32>
      %19 = vector.extract_strided_slice %18 {offsets = [0, 0], sizes = [8, 128], strides = [1, 1]} : vector<8x512xf32> to vector<8x128xf32>
      %20 = arith.negf %19 : vector<8x128xf32>
      %21 = math.exp %20 : vector<8x128xf32>
      %cst_14 = arith.constant 1.000000e+00 : f32
      %22 = vector.broadcast %cst_14 : f32 to vector<8x128xf32>
      %23 = arith.addf %22, %21 : vector<8x128xf32>
      %24 = arith.divf %22, %23 : vector<8x128xf32>
      %25 = vector.extract_strided_slice %18 {offsets = [0, 128], sizes = [8, 128], strides = [1, 1]} : vector<8x512xf32> to vector<8x128xf32>
      %26 = arith.negf %25 : vector<8x128xf32>
      %27 = math.exp %26 : vector<8x128xf32>
      %cst_15 = arith.constant 1.000000e+00 : f32
      %28 = vector.broadcast %cst_15 : f32 to vector<8x128xf32>
      %29 = arith.addf %28, %27 : vector<8x128xf32>
      %30 = arith.divf %28, %29 : vector<8x128xf32>
      %31 = vector.extract_strided_slice %18 {offsets = [0, 256], sizes = [8, 128], strides = [1, 1]} : vector<8x512xf32> to vector<8x128xf32>
      %32 = math.tanh %31 : vector<8x128xf32>
      %33 = vector.extract_strided_slice %18 {offsets = [0, 384], sizes = [8, 128], strides = [1, 1]} : vector<8x512xf32> to vector<8x128xf32>
      %34 = arith.negf %33 : vector<8x128xf32>
      %35 = math.exp %34 : vector<8x128xf32>
      %cst_16 = arith.constant 1.000000e+00 : f32
      %36 = vector.broadcast %cst_16 : f32 to vector<8x128xf32>
      %37 = arith.addf %36, %35 : vector<8x128xf32>
      %38 = arith.divf %36, %37 : vector<8x128xf32>
      %39 = arith.mulf %30, %12 : vector<8x128xf32>
      %40 = arith.mulf %24, %32 : vector<8x128xf32>
      %41 = arith.addf %39, %40 : vector<8x128xf32>
      %42 = math.tanh %41 : vector<8x128xf32>
      %43 = arith.mulf %38, %42 : vector<8x128xf32>
      %c0_17 = arith.constant 0 : index
      %c0_18 = arith.constant 0 : index
      %44 = vector.load %arg12[%c0_17, %c0_18] : memref<8x128xf32, #tpu.memory_space<vmem>>, vector<8x128xf32>
      tpu.vector_store %arg12[%c0_17, %c0_18], %43 {strides = array<i32>} : memref<8x128xf32, #tpu.memory_space<vmem>>, vector<8x128xf32>,
      %c0_19 = arith.constant 0 : index
      %c0_20 = arith.constant 0 : index
      %45 = vector.load %arg13[%c0_19, %c0_20] : memref<8x128xf32, #tpu.memory_space<vmem>>, vector<8x128xf32>
      tpu.vector_store %arg13[%c0_19, %c0_20], %41 {strides = array<i32>} : memref<8x128xf32, #tpu.memory_space<vmem>>, vector<8x128xf32>,
    } else {
    }
    %c8_i32_2 = arith.constant 8 : i32
    %6 = arith.cmpi sge, %arg0, %c8_i32_2 : i32
    %7 = arith.extui %6 : i1 to i32
    %c0_i32_3 = arith.constant 0 : i32
    %8 = arith.cmpi ne, %7, %c0_i32_3 : i32
    scf.if %8 {
      %c8_i32_4 = arith.constant 8 : i32
      %9 = arith.subi %arg0, %c8_i32_4 : i32
      %c1_i32 = arith.constant 1 : i32
      %10 = arith.subi %9, %c1_i32 : i32
      %c0_i32_5 = arith.constant 0 : i32
      %11 = arith.maxsi %10, %c0_i32_5 : i32
      %12 = arith.index_cast %11 : i32 to index
      %13 = memref.load %arg1[%12] : memref<7xi32, #tpu.memory_space<smem>>
      %c0_i32_6 = arith.constant 0 : i32
      %14 = arith.cmpi eq, %9, %c0_i32_6 : i32
      %c1_i32_7 = arith.constant 1 : i32
      %15 = arith.cmpi eq, %13, %c1_i32_7 : i32
      %16 = arith.ori %14, %15 : i1
      %17 = arith.extui %16 : i1 to i32
      %c0_i32_8 = arith.constant 0 : i32
      %18 = arith.cmpi ne, %17, %c0_i32_8 : i32
      scf.if %18 {
        %c0_40 = arith.constant 0 : index
        %c0_41 = arith.constant 0 : index
        %c0_42 = arith.constant 0 : index
        %79 = vector.load %arg3[%c0_40, %c0_41, %c0_42] : memref<1x8x128xf32, #tpu.memory_space<vmem>>, vector<1x8x128xf32>
        %80 = vector.shape_cast %79 : vector<1x8x128xf32> to vector<8x128xf32>
        %c0_43 = arith.constant 0 : index
        %c0_44 = arith.constant 0 : index
        %81 = vector.load %arg14[%c0_43, %c0_44] : memref<8x128xf32, #tpu.memory_space<vmem>>, vector<8x128xf32>
        tpu.vector_store %arg14[%c0_43, %c0_44], %80 {strides = array<i32>} : memref<8x128xf32, #tpu.memory_space<vmem>>, vector<8x128xf32>,
      } else {
      }
      %c0 = arith.constant 0 : index
      %c0_9 = arith.constant 0 : index
      %19 = vector.load %arg14[%c0, %c0_9] : memref<8x128xf32, #tpu.memory_space<vmem>>, vector<8x128xf32>
      %c0_10 = arith.constant 0 : index
      %c0_11 = arith.constant 0 : index
      %20 = vector.load %arg12[%c0_10, %c0_11] : memref<8x128xf32, #tpu.memory_space<vmem>>, vector<8x128xf32>
      %c0_12 = arith.constant 0 : index
      %c0_13 = arith.constant 0 : index
      %21 = vector.load %arg13[%c0_12, %c0_13] : memref<8x128xf32, #tpu.memory_space<vmem>>, vector<8x128xf32>
      %22 = tpu.concatenate %19, %20 in 1 : vector<8x128xf32>, vector<8x128xf32> -> vector<8x256xf32>
      %c0_14 = arith.constant 0 : index
      %c0_15 = arith.constant 0 : index
      %23 = vector.load %arg6[%c0_14, %c0_15] : memref<256x512xf32, #tpu.memory_space<vmem>>, vector<256x512xf32>
      %cst = arith.constant dense<0.000000e+00> : vector<8x512xf32>
      %24 = tpu.matmul %22, %23, %cst {dimension_numbers = #tpu.dot_dimension_numbers<[1], [0], [0], [1], [0, 0, 1, 1], [], []>} : vector<8x256xf32>, vector<256x512xf32>, vector<8x512xf32> -> vector<8x512xf32>
      %c0_16 = arith.constant 0 : index
      %c0_17 = arith.constant 0 : index
      %25 = vector.load %arg7[%c0_16, %c0_17] : memref<1x512xf32, #tpu.memory_space<vmem>>, vector<1x512xf32>
      %26 = vector.broadcast %25 : vector<1x512xf32> to vector<8x512xf32>
      %27 = arith.addf %24, %26 : vector<8x512xf32>
      %28 = vector.extract_strided_slice %27 {offsets = [0, 0], sizes = [8, 128], strides = [1, 1]} : vector<8x512xf32> to vector<8x128xf32>
      %29 = arith.negf %28 : vector<8x128xf32>
      %30 = math.exp %29 : vector<8x128xf32>
      %cst_18 = arith.constant 1.000000e+00 : f32
      %31 = vector.broadcast %cst_18 : f32 to vector<8x128xf32>
      %32 = arith.addf %31, %30 : vector<8x128xf32>
      %33 = arith.divf %31, %32 : vector<8x128xf32>
      %34 = vector.extract_strided_slice %27 {offsets = [0, 128], sizes = [8, 128], strides = [1, 1]} : vector<8x512xf32> to vector<8x128xf32>
      %35 = arith.negf %34 : vector<8x128xf32>
      %36 = math.exp %35 : vector<8x128xf32>
      %cst_19 = arith.constant 1.000000e+00 : f32
      %37 = vector.broadcast %cst_19 : f32 to vector<8x128xf32>
      %38 = arith.addf %37, %36 : vector<8x128xf32>
      %39 = arith.divf %37, %38 : vector<8x128xf32>
      %40 = vector.extract_strided_slice %27 {offsets = [0, 256], sizes = [8, 128], strides = [1, 1]} : vector<8x512xf32> to vector<8x128xf32>
      %41 = math.tanh %40 : vector<8x128xf32>
      %42 = vector.extract_strided_slice %27 {offsets = [0, 384], sizes = [8, 128], strides = [1, 1]} : vector<8x512xf32> to vector<8x128xf32>
      %43 = arith.negf %42 : vector<8x128xf32>
      %44 = math.exp %43 : vector<8x128xf32>
      %cst_20 = arith.constant 1.000000e+00 : f32
      %45 = vector.broadcast %cst_20 : f32 to vector<8x128xf32>
      %46 = arith.addf %45, %44 : vector<8x128xf32>
      %47 = arith.divf %45, %46 : vector<8x128xf32>
      %48 = arith.mulf %39, %21 : vector<8x128xf32>
      %49 = arith.mulf %33, %41 : vector<8x128xf32>
      %50 = arith.addf %48, %49 : vector<8x128xf32>
      %51 = math.tanh %50 : vector<8x128xf32>
      %52 = arith.mulf %47, %51 : vector<8x128xf32>
      %c0_21 = arith.constant 0 : index
      %c0_22 = arith.constant 0 : index
      %53 = vector.load %arg12[%c0_21, %c0_22] : memref<8x128xf32, #tpu.memory_space<vmem>>, vector<8x128xf32>
      tpu.vector_store %arg12[%c0_21, %c0_22], %52 {strides = array<i32>} : memref<8x128xf32, #tpu.memory_space<vmem>>, vector<8x128xf32>,
      %c0_23 = arith.constant 0 : index
      %c0_24 = arith.constant 0 : index
      %54 = vector.load %arg13[%c0_23, %c0_24] : memref<8x128xf32, #tpu.memory_space<vmem>>, vector<8x128xf32>
      tpu.vector_store %arg13[%c0_23, %c0_24], %50 {strides = array<i32>} : memref<8x128xf32, #tpu.memory_space<vmem>>, vector<8x128xf32>,
      %c0_25 = arith.constant 0 : index
      %c0_26 = arith.constant 0 : index
      %55 = vector.load %arg8[%c0_25, %c0_26] : memref<128x128xf32, #tpu.memory_space<vmem>>, vector<128x128xf32>
      %cst_27 = arith.constant dense<0.000000e+00> : vector<8x128xf32>
      %56 = tpu.matmul %52, %55, %cst_27 {dimension_numbers = #tpu.dot_dimension_numbers<[1], [0], [0], [1], [0, 0, 1, 1], [], []>} : vector<8x128xf32>, vector<128x128xf32>, vector<8x128xf32> -> vector<8x128xf32>
      %c0_28 = arith.constant 0 : index
      %c0_29 = arith.constant 0 : index
      %57 = vector.load %arg9[%c0_28, %c0_29] : memref<1x128xf32, #tpu.memory_space<vmem>>, vector<1x128xf32>
      %58 = vector.broadcast %57 : vector<1x128xf32> to vector<8x128xf32>
      %59 = arith.addf %56, %58 : vector<8x128xf32>
      %c0_30 = arith.constant 0 : index
      %c0_31 = arith.constant 0 : index
      %c0_32 = arith.constant 0 : index
      %60 = vector.load %arg11[%c0_30, %c0_31, %c0_32] : memref<1x8x128xf32, #tpu.memory_space<vmem>>, vector<1x8x128xf32>
      %61 = vector.shape_cast %60 : vector<1x8x128xf32> to vector<8x128xf32>
      %62 = vector.shape_cast %59 : vector<8x128xf32> to vector<1x8x128xf32>
      tpu.vector_store %arg11[%c0_30, %c0_31, %c0_32], %62 {strides = array<i32>} : memref<1x8x128xf32, #tpu.memory_space<vmem>>, vector<1x8x128xf32>,
      %63 = tpu.iota {dimensions = array<i32: 1>} : vector<8x128xi32>
      %cst_33 = arith.constant dense<0xFF800000> : vector<8xf32>
      %64 = vector.multi_reduction <maximumf>, %59, %cst_33 [1] : vector<8x128xf32> to vector<8xf32>
      %65 = vector.shape_cast %64 : vector<8xf32> to vector<8x1xf32>
      %66 = vector.broadcast %65 : vector<8x1xf32> to vector<8x128xf32>
      %67 = arith.cmpf oeq, %59, %66 : vector<8x128xf32>
      %c128_i32 = arith.constant 128 : i32
      %68 = vector.broadcast %c128_i32 : i32 to vector<8x128xi32>
      %69 = arith.select %67, %63, %68 : vector<8x128xi1>, vector<8x128xi32>
      %cst_34 = arith.constant dense<2147483647> : vector<8xi32>
      %70 = vector.multi_reduction <minsi>, %69, %cst_34 [1] : vector<8x128xi32> to vector<8xi32>
      %71 = vector.shape_cast %70 : vector<8xi32> to vector<8x1xi32>
      %72 = vector.broadcast %71 : vector<8x1xi32> to vector<8x128xi32>
      %73 = arith.cmpi eq, %63, %72 : vector<8x128xi32>
      %74 = arith.extui %73 : vector<8x128xi1> to vector<8x128xi32>
      %75 = arith.sitofp %74 : vector<8x128xi32> to vector<8x128xf32>
      %c0_35 = arith.constant 0 : index
      %c0_36 = arith.constant 0 : index
      %76 = vector.load %arg10[%c0_35, %c0_36] : memref<128x128xf32, #tpu.memory_space<vmem>>, vector<128x128xf32>
      %cst_37 = arith.constant dense<0.000000e+00> : vector<8x128xf32>
      %77 = tpu.matmul %75, %76, %cst_37 {dimension_numbers = #tpu.dot_dimension_numbers<[1], [0], [0], [1], [0, 0, 1, 1], [], []>} : vector<8x128xf32>, vector<128x128xf32>, vector<8x128xf32> -> vector<8x128xf32>
      %c0_38 = arith.constant 0 : index
      %c0_39 = arith.constant 0 : index
      %78 = vector.load %arg14[%c0_38, %c0_39] : memref<8x128xf32, #tpu.memory_space<vmem>>, vector<8x128xf32>
      tpu.vector_store %arg14[%c0_38, %c0_39], %77 {strides = array<i32>} : memref<8x128xf32, #tpu.memory_space<vmem>>, vector<8x128xf32>,
    } else {
    }
    return
  }
  func.func @transform_0(%arg0: i32, %arg1: memref<7xi32, #tpu.memory_space<smem>>) -> (i32, i32, i32) {
    %c7_i32 = arith.constant 7 : i32
    %0 = arith.minsi %arg0, %c7_i32 : i32
    %c0_i32 = arith.constant 0 : i32
    %c0_i32_0 = arith.constant 0 : i32
    %c0_i32_1 = arith.constant 0 : i32
    return %0, %c0_i32, %c0_i32_0 : i32, i32, i32
  }
  func.func @transform_1(%arg0: i32, %arg1: memref<7xi32, #tpu.memory_space<smem>>) -> (i32, i32, i32) {
    %c8_i32 = arith.constant 8 : i32
    %0 = arith.subi %arg0, %c8_i32 : i32
    %c0_i32 = arith.constant 0 : i32
    %1 = arith.maxsi %0, %c0_i32 : i32
    %c0_i32_0 = arith.constant 0 : i32
    %c0_i32_1 = arith.constant 0 : i32
    %c0_i32_2 = arith.constant 0 : i32
    return %1, %c0_i32_0, %c0_i32_1 : i32, i32, i32
  }
  func.func @transform_2(%arg0: i32, %arg1: memref<7xi32, #tpu.memory_space<smem>>) -> (i32, i32) {
    %c0_i32 = arith.constant 0 : i32
    %c0_i32_0 = arith.constant 0 : i32
    %c0_i32_1 = arith.constant 0 : i32
    return %c0_i32, %c0_i32_0 : i32, i32
  }
  func.func @transform_3(%arg0: i32, %arg1: memref<7xi32, #tpu.memory_space<smem>>) -> (i32, i32) {
    %c0_i32 = arith.constant 0 : i32
    %c0_i32_0 = arith.constant 0 : i32
    %c0_i32_1 = arith.constant 0 : i32
    return %c0_i32, %c0_i32_0 : i32, i32
  }
  func.func @transform_4(%arg0: i32, %arg1: memref<7xi32, #tpu.memory_space<smem>>) -> (i32, i32) {
    %c0_i32 = arith.constant 0 : i32
    %c0_i32_0 = arith.constant 0 : i32
    %c0_i32_1 = arith.constant 0 : i32
    return %c0_i32, %c0_i32_0 : i32, i32
  }
  func.func @transform_5(%arg0: i32, %arg1: memref<7xi32, #tpu.memory_space<smem>>) -> (i32, i32) {
    %c0_i32 = arith.constant 0 : i32
    %c0_i32_0 = arith.constant 0 : i32
    %c0_i32_1 = arith.constant 0 : i32
    return %c0_i32, %c0_i32_0 : i32, i32
  }
  func.func @transform_6(%arg0: i32, %arg1: memref<7xi32, #tpu.memory_space<smem>>) -> (i32, i32) {
    %c0_i32 = arith.constant 0 : i32
    %c0_i32_0 = arith.constant 0 : i32
    %c0_i32_1 = arith.constant 0 : i32
    return %c0_i32, %c0_i32_0 : i32, i32
  }
  func.func @transform_7(%arg0: i32, %arg1: memref<7xi32, #tpu.memory_space<smem>>) -> (i32, i32) {
    %c0_i32 = arith.constant 0 : i32
    %c0_i32_0 = arith.constant 0 : i32
    %c0_i32_1 = arith.constant 0 : i32
    return %c0_i32, %c0_i32_0 : i32, i32
  }
  func.func @transform_8(%arg0: i32, %arg1: memref<7xi32, #tpu.memory_space<smem>>) -> (i32, i32) {
    %c0_i32 = arith.constant 0 : i32
    %c0_i32_0 = arith.constant 0 : i32
    %c0_i32_1 = arith.constant 0 : i32
    return %c0_i32, %c0_i32_0 : i32, i32
  }
  func.func @transform_9(%arg0: i32, %arg1: memref<7xi32, #tpu.memory_space<smem>>) -> (i32, i32, i32) {
    %c8_i32 = arith.constant 8 : i32
    %0 = arith.subi %arg0, %c8_i32 : i32
    %c1_i32 = arith.constant 1 : i32
    %1 = arith.addi %0, %c1_i32 : i32
    %c0_i32 = arith.constant 0 : i32
    %2 = arith.maxsi %1, %c0_i32 : i32
    %c0_i32_0 = arith.constant 0 : i32
    %c0_i32_1 = arith.constant 0 : i32
    %c0_i32_2 = arith.constant 0 : i32
    return %2, %c0_i32_0, %c0_i32_1 : i32, i32, i32
  }
}

</mosaic_0001>

<llo_original>
// kernel: seq2seq_forward.1
$region0: #{seq2seq_forward.1}
  #allocation0 [shape = 'u32[]', space=smem, size = 0x4, offset = 0x4, fixed_abs, tag = 'smem constant byte address 0x4 - core index']
  #allocation1 [shape = 'u32[72,128]{1,0:T(1,128)}', space=vmem, size = 0x9000, scoped, tag = 'internal scratch']
  #allocation2 [shape = 'f32[8,128]{1,0:T(8,128)}', space=vmem, size = 0x1000, scoped, tag = 'scratch operand']
  #allocation3 [shape = 'f32[8,128]{1,0:T(8,128)}', space=vmem, size = 0x1000, scoped, tag = 'scratch operand']
  #allocation4 [shape = 'f32[8,128]{1,0:T(8,128)}', space=vmem, size = 0x1000, scoped, tag = 'scratch operand']
  #allocation5 [shape = 's32[1]{0}', space=sflag, size = 0x4, scoped, tag = 'scoped memory for seq2seq_forward.1']
  #allocation6 [shape = 'u8[512]{0}', space=smem, size = 0x200, scoped, tag = 'prefetched SMEM operand 0']
  %s0 = inlined_call_operand.vmem [shape: s32[7], index: 0, kind: input, shape index: {}]
  %s1 = inlined_call_operand.vmem [shape: f32[8,8,128], index: 1, kind: input, shape index: {}]
  %s2 = inlined_call_operand.vmem [shape: f32[8,8,128], index: 2, kind: input, shape index: {}]
  %s3 = inlined_call_operand.vmem [shape: f32[256,512], index: 3, kind: input, shape index: {}]
  %s4 = inlined_call_operand.vmem [shape: f32[1,512], index: 4, kind: input, shape index: {}]
  %s5 = inlined_call_operand.hbm [shape: f32[256,512], index: 5, kind: input, shape index: {}]
  %s6 = inlined_call_operand.vmem [shape: f32[1,512], index: 6, kind: input, shape index: {}]
  %s7 = inlined_call_operand.hbm [shape: f32[128,128], index: 7, kind: input, shape index: {}]
  %s8 = inlined_call_operand.vmem [shape: f32[1,128], index: 8, kind: input, shape index: {}]
  %s9 = inlined_call_operand.vmem [shape: f32[128,128], index: 9, kind: input, shape index: {}]
  %s10 = inlined_call_operand.hbm [shape: f32[8,8,128], index: 10, kind: output, shape index: {}]
  %s11 = sld [smem:[#allocation0]]
  $region93: #{seq2seq_forward.1} parent=0
    _
  %s13 = ssub.s32 1, %s11
  %s14 = scalar_select 0, %s13, %s11
  %s16 = sshll.u32 %s0, 4
  %s17 = int_to_ptr.vmem [resolvable:$true] %s16
  %19 = dma.vmem_to_smem %s17, 16, [#allocation6], [#allocation5]
  %21 = dma.done [#allocation5], 16
  %22 = sfence
  $region1: #{seq2seq_forward.1} parent=0
    #allocation7 [shape = 'u8[524288]{0}', space=vmem, size = 0x80000, scoped, tag = 'input window, operand 5, single buffered']
    #allocation8 [shape = 's32[2]{0}', space=sflag, size = 0x8, scoped, tag = 'scoped memory for seq2seq_forward.1']
    #allocation9 [shape = 's32[2]{0}', space=sflag, size = 0x8, scoped, tag = 'scoped memory for seq2seq_forward.1']
    #allocation10 [shape = 'u8[65536]{0}', space=vmem, size = 0x10000, scoped, tag = 'input window, operand 7, single buffered']
    #allocation11 [shape = 's32[1]{0}', space=sflag, size = 0x4, scoped, tag = 'scoped memory for seq2seq_forward.1']
    #allocation12 [shape = 'u8[8192]{0}', space=vmem, size = 0x2000, scoped, tag = 'output window, operand 0']
    %23 = vsyncpa [#allocation8], 0
    %24 = vsyncpa [#allocation11], 0
    %25 = vsyncpa [#allocation9], 0
    %s26 = scalar_lea.sflag [#allocation9], 1
    %27 = vsyncpa %s26, 0
    loop: start=0, step=1, limit=17
    $region2: #{seq2seq_forward.1} parent=1 // loop_pre_header
      _
    $region3: #{seq2seq_forward.1} parent=1 // loop_header
      %s29 = sphi 0, %s33
      %p30 = scmp.ge.s32.totalorder %s29, 17
      %s43 = sphi 0, %s45
      %s46 = sphi 0, %s43
      %s47 = sphi 0, %s46
      %s63 = sphi 0, %s47
      %s75 = sphi 0, %s77
      %s78 = sphi 0, %s75
      %s79 = sphi 0, %s78
      %s95 = sphi 0, %s79
      %s99 = sphi 0, %s99
      %s101 = sphi 0, %s99
      %s102 = sphi 0, %s101
      %s116 = sphi 0, %s102
      %s120 = sphi 0, %s120
      %s122 = sphi 0, %s120
      %s123 = sphi 0, %s122
      %s137 = sphi 0, %s123
      %s141 = sphi 0, %s141
      %s143 = sphi 0, %s141
      %s144 = sphi 0, %s143
      %s158 = sphi 0, %s144
      %s162 = sphi 0, %s162
      %s164 = sphi 0, %s162
      %s165 = sphi 0, %s164
      %s179 = sphi 0, %s165
      %s183 = sphi 0, %s183
      %s185 = sphi 0, %s183
      %s186 = sphi 0, %s185
      %s200 = sphi 0, %s186
      %s204 = sphi 0, %s204
      %s206 = sphi 0, %s204
      %s207 = sphi 0, %s206
      %s221 = sphi 0, %s207
      %s225 = sphi 0, %s225
      %s227 = sphi 0, %s225
      %s228 = sphi 0, %s227
      %s242 = sphi 0, %s228
      %s254 = sphi 0, %s256
      %s257 = sphi 0, %s254
      %s258 = sphi 0, %s257
      %s274 = sphi 0, %s258
    $region4: #{seq2seq_forward.1} parent=1 // loop_header_branch
      %32 = sbr.rel (%p30) target = $region8
    $region5: #{seq2seq_forward.1} parent=1 // loop_body
      %s34 = ssub.s32 %s29, 1
      %s35 = ssub.s32 %s29, 2
      %s36 = sadd.s32 %s29, 1
      %p37 = scmp.lt.s32.totalorder %s29, 7
      %s38 = scalar_select %p37, %s29, 7
      %p39 = scmp.lt.s32.totalorder %s36, 7
      %s40 = scalar_select %p39, %s36, 7
      %s41 = ssub.s32 %s38, %s40
      %p42 = scmp.eq.s32.totalorder %s41, 0
      %s44 = sadd.s32 %s43, 1
      %s45 = scalar_select %p42, %s43, %s44
      %p48 = pneg %p42
      %p49 = scmp.eq.s32.totalorder %s29, 14
      %p50 = por %p48, %p49
      %p51 = scmp.ne.s32.totalorder %s43, %s46
      %p52 = scmp.eq.s32.totalorder %s29, 0
      %p53 = por %p51, %p52
      %p54 = scmp.ne.s32.totalorder %s43, %s46
      %p55 = scmp.eq.s32.totalorder %s34, 14
      %p56 = por %p54, %p55
      %p57 = scmp.ne.s32.totalorder %s46, %s47
      %p58 = scmp.eq.s32.totalorder %s34, 0
      %p59 = por %p57, %p58
      %p60 = scmp.ne.s32.totalorder %s46, %s47
      %p61 = scmp.eq.s32.totalorder %s35, 14
      %p62 = por %p60, %p61
      %p64 = scmp.ne.s32.totalorder %s47, %s63
      %p65 = scmp.eq.s32.totalorder %s35, 0
      %p66 = por %p64, %p65
      %s67 = ssub.s32 %s29, 8
      %p68 = scmp.gt.s32.totalorder %s67, 0
      %s69 = scalar_select %p68, %s67, 0
      %s70 = ssub.s32 %s36, 8
      %p71 = scmp.gt.s32.totalorder %s70, 0
      %s72 = scalar_select %p71, %s70, 0
      %s73 = ssub.s32 %s69, %s72
      %p74 = scmp.eq.s32.totalorder %s73, 0
      %s76 = sadd.s32 %s75, 1
      %s77 = scalar_select %p74, %s75, %s76
      %p80 = pneg %p74
      %p81 = scmp.eq.s32.totalorder %s29, 14
      %p82 = por %p80, %p81
      %p83 = scmp.ne.s32.totalorder %s75, %s78
      %p84 = scmp.eq.s32.totalorder %s29, 0
      %p85 = por %p83, %p84
      %p86 = scmp.ne.s32.totalorder %s75, %s78
      %p87 = scmp.eq.s32.totalorder %s34, 14
      %p88 = por %p86, %p87
      %p89 = scmp.ne.s32.totalorder %s78, %s79
      %p90 = scmp.eq.s32.totalorder %s34, 0
      %p91 = por %p89, %p90
      %p92 = scmp.ne.s32.totalorder %s78, %s79
      %p93 = scmp.eq.s32.totalorder %s35, 14
      %p94 = por %p92, %p93
      %p96 = scmp.ne.s32.totalorder %s79, %s95
      %p97 = scmp.eq.s32.totalorder %s35, 0
      %p98 = por %p96, %p97
      %s100 = sadd.s32 %s99, 1
      %p103 = scmp.eq.s32.totalorder %s29, 14
      %p104 = scmp.ne.s32.totalorder %s99, %s101
      %p105 = scmp.eq.s32.totalorder %s29, 0
      %p106 = por %p104, %p105
      %p107 = scmp.ne.s32.totalorder %s99, %s101
      %p108 = scmp.eq.s32.totalorder %s34, 14
      %p109 = por %p107, %p108
      %p110 = scmp.ne.s32.totalorder %s101, %s102
      %p111 = scmp.eq.s32.totalorder %s34, 0
      %p112 = por %p110, %p111
      %p113 = scmp.ne.s32.totalorder %s101, %s102
      %p114 = scmp.eq.s32.totalorder %s35, 14
      %p115 = por %p113, %p114
      %p117 = scmp.ne.s32.totalorder %s102, %s116
      %p118 = scmp.eq.s32.totalorder %s35, 0
      %p119 = por %p117, %p118
      %s121 = sadd.s32 %s120, 1
      %p124 = scmp.eq.s32.totalorder %s29, 14
      %p125 = scmp.ne.s32.totalorder %s120, %s122
      %p126 = scmp.eq.s32.totalorder %s29, 0
      %p127 = por %p125, %p126
      %p128 = scmp.ne.s32.totalorder %s120, %s122
      %p129 = scmp.eq.s32.totalorder %s34, 14
      %p130 = por %p128, %p129
      %p131 = scmp.ne.s32.totalorder %s122, %s123
      %p132 = scmp.eq.s32.totalorder %s34, 0
      %p133 = por %p131, %p132
      %p134 = scmp.ne.s32.totalorder %s122, %s123
      %p135 = scmp.eq.s32.totalorder %s35, 14
      %p136 = por %p134, %p135
      %p138 = scmp.ne.s32.totalorder %s123, %s137
      %p139 = scmp.eq.s32.totalorder %s35, 0
      %p140 = por %p138, %p139
      %s142 = sadd.s32 %s141, 1
      %p145 = scmp.eq.s32.totalorder %s29, 14
      %p146 = scmp.ne.s32.totalorder %s141, %s143
      %p147 = scmp.eq.s32.totalorder %s29, 0
      %p148 = por %p146, %p147
      %p149 = scmp.ne.s32.totalorder %s141, %s143
      %p150 = scmp.eq.s32.totalorder %s34, 14
      %p151 = por %p149, %p150
      %p152 = scmp.ne.s32.totalorder %s143, %s144
      %p153 = scmp.eq.s32.totalorder %s34, 0
      %p154 = por %p152, %p153
      %p155 = scmp.ne.s32.totalorder %s143, %s144
      %p156 = scmp.eq.s32.totalorder %s35, 14
      %p157 = por %p155, %p156
      %p159 = scmp.ne.s32.totalorder %s144, %s158
      %p160 = scmp.eq.s32.totalorder %s35, 0
      %p161 = por %p159, %p160
      %s163 = sadd.s32 %s162, 1
      %p166 = scmp.eq.s32.totalorder %s29, 14
      %p167 = scmp.ne.s32.totalorder %s162, %s164
      %p168 = scmp.eq.s32.totalorder %s29, 0
      %p169 = por %p167, %p168
      %p170 = scmp.ne.s32.totalorder %s162, %s164
      %p171 = scmp.eq.s32.totalorder %s34, 14
      %p172 = por %p170, %p171
      %p173 = scmp.ne.s32.totalorder %s164, %s165
      %p174 = scmp.eq.s32.totalorder %s34, 0
      %p175 = por %p173, %p174
      %p176 = scmp.ne.s32.totalorder %s164, %s165
      %p177 = scmp.eq.s32.totalorder %s35, 14
      %p178 = por %p176, %p177
      %p180 = scmp.ne.s32.totalorder %s165, %s179
      %p181 = scmp.eq.s32.totalorder %s35, 0
      %p182 = por %p180, %p181
      %s184 = sadd.s32 %s183, 1
      %p187 = scmp.eq.s32.totalorder %s29, 14
      %p188 = scmp.ne.s32.totalorder %s183, %s185
      %p189 = scmp.eq.s32.totalorder %s29, 0
      %p190 = por %p188, %p189
      %p191 = scmp.ne.s32.totalorder %s183, %s185
      %p192 = scmp.eq.s32.totalorder %s34, 14
      %p193 = por %p191, %p192
      %p194 = scmp.ne.s32.totalorder %s185, %s186
      %p195 = scmp.eq.s32.totalorder %s34, 0
      %p196 = por %p194, %p195
      %p197 = scmp.ne.s32.totalorder %s185, %s186
      %p198 = scmp.eq.s32.totalorder %s35, 14
      %p199 = por %p197, %p198
      %p201 = scmp.ne.s32.totalorder %s186, %s200
      %p202 = scmp.eq.s32.totalorder %s35, 0
      %p203 = por %p201, %p202
      %s205 = sadd.s32 %s204, 1
      %p208 = scmp.eq.s32.totalorder %s29, 14
      %p209 = scmp.ne.s32.totalorder %s204, %s206
      %p210 = scmp.eq.s32.totalorder %s29, 0
      %p211 = por %p209, %p210
      %p212 = scmp.ne.s32.totalorder %s204, %s206
      %p213 = scmp.eq.s32.totalorder %s34, 14
      %p214 = por %p212, %p213
      %p215 = scmp.ne.s32.totalorder %s206, %s207
      %p216 = scmp.eq.s32.totalorder %s34, 0
      %p217 = por %p215, %p216
      %p218 = scmp.ne.s32.totalorder %s206, %s207
      %p219 = scmp.eq.s32.totalorder %s35, 14
      %p220 = por %p218, %p219
      %p222 = scmp.ne.s32.totalorder %s207, %s221
      %p223 = scmp.eq.s32.totalorder %s35, 0
      %p224 = por %p222, %p223
      %s226 = sadd.s32 %s225, 1
      %p229 = scmp.eq.s32.totalorder %s29, 14
      %p230 = scmp.ne.s32.totalorder %s225, %s227
      %p231 = scmp.eq.s32.totalorder %s29, 0
      %p232 = por %p230, %p231
      %p233 = scmp.ne.s32.totalorder %s225, %s227
      %p234 = scmp.eq.s32.totalorder %s34, 14
      %p235 = por %p233, %p234
      %p236 = scmp.ne.s32.totalorder %s227, %s228
      %p237 = scmp.eq.s32.totalorder %s34, 0
      %p238 = por %p236, %p237
      %p239 = scmp.ne.s32.totalorder %s227, %s228
      %p240 = scmp.eq.s32.totalorder %s35, 14
      %p241 = por %p239, %p240
      %p243 = scmp.ne.s32.totalorder %s228, %s242
      %p244 = scmp.eq.s32.totalorder %s35, 0
      %p245 = por %p243, %p244
      %s246 = sadd.s32 %s29, 4294967289
      %p247 = scmp.gt.s32.totalorder %s246, 0
      %s248 = scalar_select %p247, %s246, 0
      %s249 = sadd.s32 %s36, 4294967289
      %p250 = scmp.gt.s32.totalorder %s249, 0
      %s251 = scalar_select %p250, %s249, 0
      %s252 = ssub.s32 %s248, %s251
      %p253 = scmp.eq.s32.totalorder %s252, 0
      %s255 = sadd.s32 %s254, 1
      %s256 = scalar_select %p253, %s254, %s255
      %p259 = pneg %p253
      %p260 = scmp.eq.s32.totalorder %s29, 14
      %p261 = por %p259, %p260
      %p262 = scmp.ne.s32.totalorder %s254, %s257
      %p263 = scmp.eq.s32.totalorder %s29, 0
      %p264 = por %p262, %p263
      %p265 = scmp.ne.s32.totalorder %s254, %s257
      %p266 = scmp.eq.s32.totalorder %s34, 14
      %p267 = por %p265, %p266
      %p268 = scmp.ne.s32.totalorder %s257, %s258
      %p269 = scmp.eq.s32.totalorder %s34, 0
      %p270 = por %p268, %p269
      %p271 = scmp.ne.s32.totalorder %s257, %s258
      %p272 = scmp.eq.s32.totalorder %s35, 14
      %p273 = por %p271, %p272
      %p275 = scmp.ne.s32.totalorder %s258, %s274
      %p276 = scmp.eq.s32.totalorder %s35, 0
      %p277 = por %p275, %p276
      %p278 = scmp.le.s32.totalorder 1, %s29
      %p279 = scmp.lt.s32.totalorder %s29, 16
      %p280 = pnand %p278, %p279
      %p281 = pneg %p280
      // Predicated region
      $region9: #{seq2seq_forward.1} parent=5 // pred_check
        _
      $region10: #{seq2seq_forward.1} parent=5 // pred_check_branch
        %283 = sbr.rel (%p280) target = $region12
      $region11: #{seq2seq_forward.1} parent=5 // pred_region
        %s284 = ssub.s32 %s29, 1
        // Predicated region
        $region13: #{seq2seq_forward.1} parent=11 // pred_check
          %p285 = pneg %p112
        $region14: #{seq2seq_forward.1} parent=11 // pred_check_branch
          %287 = sbr.rel (%p285) target = $region16
        $region15: #{seq2seq_forward.1} parent=11 // pred_region
          _
        $region16: #{seq2seq_forward.1} parent=11 // pred_fallthru
          _
        // Predicated region
        $region17: #{seq2seq_forward.1} parent=11 // pred_check
          %p288 = pneg %p133
        $region18: #{seq2seq_forward.1} parent=11 // pred_check_branch
          %290 = sbr.rel (%p288) target = $region20
        $region19: #{seq2seq_forward.1} parent=11 // pred_region
          _
        $region20: #{seq2seq_forward.1} parent=11 // pred_fallthru
          _
        // Predicated region
        $region21: #{seq2seq_forward.1} parent=11 // pred_check
          %p291 = pneg %p154
        $region22: #{seq2seq_forward.1} parent=11 // pred_check_branch
          %293 = sbr.rel (%p291) target = $region24
        $region23: #{seq2seq_forward.1} parent=11 // pred_region
          %295 = vsyncadd [#allocation8], 0
          %s296 = sshll.u32 %s5, 4
          %s297 = int_to_ptr.hbm [resolvable:$true] %s296
          %s298 = sshll.u32 [#allocation7], 4
          %s299 = int_to_ptr.vmem [resolvable:$true] %s298
          %304 = dma.hbm_to_vmem [thread:$0]  %s297, 16384, %s299, [#allocation8], 512, 512, 32
        $region24: #{seq2seq_forward.1} parent=11 // pred_fallthru
          _
        // Predicated region
        $region25: #{seq2seq_forward.1} parent=11 // pred_check
          %p305 = pneg %p175
        $region26: #{seq2seq_forward.1} parent=11 // pred_check_branch
          %307 = sbr.rel (%p305) target = $region28
        $region27: #{seq2seq_forward.1} parent=11 // pred_region
          _
        $region28: #{seq2seq_forward.1} parent=11 // pred_fallthru
          _
        // Predicated region
        $region29: #{seq2seq_forward.1} parent=11 // pred_check
          %p308 = pneg %p196
        $region30: #{seq2seq_forward.1} parent=11 // pred_check_branch
          %310 = sbr.rel (%p308) target = $region32
        $region31: #{seq2seq_forward.1} parent=11 // pred_region
          %312 = vsyncadd [#allocation11], 0
          %s313 = sshll.u32 %s7, 4
          %s314 = int_to_ptr.hbm [resolvable:$true] %s313
          %s315 = sshll.u32 [#allocation10], 4
          %s316 = int_to_ptr.vmem [resolvable:$true] %s315
          %321 = dma.hbm_to_vmem [thread:$0]  %s314, 2048, %s316, [#allocation11], 128, 128, 8
        $region32: #{seq2seq_forward.1} parent=11 // pred_fallthru
          _
        // Predicated region
        $region33: #{seq2seq_forward.1} parent=11 // pred_check
          %p322 = pneg %p217
        $region34: #{seq2seq_forward.1} parent=11 // pred_check_branch
          %324 = sbr.rel (%p322) target = $region36
        $region35: #{seq2seq_forward.1} parent=11 // pred_region
          _
        $region36: #{seq2seq_forward.1} parent=11 // pred_fallthru
          _
        // Predicated region
        $region37: #{seq2seq_forward.1} parent=11 // pred_check
          %p325 = pneg %p238
        $region38: #{seq2seq_forward.1} parent=11 // pred_check_branch
          %327 = sbr.rel (%p325) target = $region40
        $region39: #{seq2seq_forward.1} parent=11 // pred_region
          _
        $region40: #{seq2seq_forward.1} parent=11 // pred_fallthru
          _
      $region12: #{seq2seq_forward.1} parent=5 // pred_fallthru
        _
      %p328 = scmp.lt.s32.totalorder %s29, 15
      // Predicated region
      $region41: #{seq2seq_forward.1} parent=5 // pred_check
        %p329 = pneg %p328
      $region42: #{seq2seq_forward.1} parent=5 // pred_check_branch
        %331 = sbr.rel (%p329) target = $region44
      $region43: #{seq2seq_forward.1} parent=5 // pred_region
        // Predicated region
        $region45: #{seq2seq_forward.1} parent=43 // pred_check
          %p332 = pneg %p53
        $region46: #{seq2seq_forward.1} parent=43 // pred_check_branch
          %334 = sbr.rel (%p332) target = $region48
        $region47: #{seq2seq_forward.1} parent=43 // pred_region
          %p335 = scmp.lt.s32.totalorder %s29, 7
          %s336 = scalar_select %p335, %s29, 7
          %p337 = scmp.lt.s32.totalorder %s336, 7
          %s338 = scalar_select %p337, %s336, 7
          %s339 = smul.addr %s338, 8
          %s340 = scalar_lea.vmem %s1, %s339
          %p341 = scmp.lt.s32.totalorder %s29, 7
          %s342 = scalar_select %p341, %s29, 7
        $region48: #{seq2seq_forward.1} parent=43 // pred_fallthru
          _
        // Predicated region
        $region49: #{seq2seq_forward.1} parent=43 // pred_check
          %p343 = pneg %p85
        $region50: #{seq2seq_forward.1} parent=43 // pred_check_branch
          %345 = sbr.rel (%p343) target = $region52
        $region51: #{seq2seq_forward.1} parent=43 // pred_region
          %s346 = ssub.s32 %s29, 8
          %p347 = scmp.gt.s32.totalorder %s346, 0
          %s348 = scalar_select %p347, %s346, 0
          %p349 = scmp.lt.s32.totalorder %s348, 7
          %s350 = scalar_select %p349, %s348, 7
          %s351 = smul.addr %s350, 8
          %s352 = scalar_lea.vmem %s2, %s351
          %s353 = ssub.s32 %s29, 8
          %p354 = scmp.gt.s32.totalorder %s353, 0
          %s355 = scalar_select %p354, %s353, 0
        $region52: #{seq2seq_forward.1} parent=43 // pred_fallthru
          _
      $region44: #{seq2seq_forward.1} parent=5 // pred_fallthru
        _
      %p356 = scmp.le.s32.totalorder 1, %s29
      %p357 = scmp.lt.s32.totalorder %s29, 16
      %p358 = pnand %p356, %p357
      %p359 = pneg %p358
      // Predicated region
      $region53: #{seq2seq_forward.1} parent=5 // pred_check
        _
      $region54: #{seq2seq_forward.1} parent=5 // pred_check_branch
        %361 = sbr.rel (%p358) target = $region56
      $region55: #{seq2seq_forward.1} parent=5 // pred_region
        %s362 = ssub.s32 %s29, 1
        // Predicated region
        $region57: #{seq2seq_forward.1} parent=55 // pred_check
          %p363 = pneg %p154
        $region58: #{seq2seq_forward.1} parent=55 // pred_check_branch
          %365 = sbr.rel (%p363) target = $region60
        $region59: #{seq2seq_forward.1} parent=55 // pred_region
          %367 = dma.done [#allocation8], 16384
        $region60: #{seq2seq_forward.1} parent=55 // pred_fallthru
          _
        // Predicated region
        $region61: #{seq2seq_forward.1} parent=55 // pred_check
          %p368 = pneg %p196
        $region62: #{seq2seq_forward.1} parent=55 // pred_check_branch
          %370 = sbr.rel (%p368) target = $region64
        $region63: #{seq2seq_forward.1} parent=55 // pred_region
          %372 = dma.done [#allocation11], 2048
        $region64: #{seq2seq_forward.1} parent=55 // pred_fallthru
          _
        %p373 = scmp.lt.s32.totalorder %s34, 7
        %s374 = scalar_select %p373, %s34, 7
        %p375 = scmp.lt.s32.totalorder %s374, 7
        %s376 = scalar_select %p375, %s374, 7
        %s377 = smul.addr %s376, 8
        %s378 = scalar_lea.vmem %s1, %s377
        %p379 = pneg %p59
        %p380 = pneg %p56
        %s381 = ssub.s32 %s34, 8
        %p382 = scmp.gt.s32.totalorder %s381, 0
        %s383 = scalar_select %p382, %s381, 0
        %p384 = scmp.lt.s32.totalorder %s383, 7
        %s385 = scalar_select %p384, %s383, 7
        %s386 = smul.addr %s385, 8
        %s387 = scalar_lea.vmem %s2, %s386
        %p388 = pneg %p91
        %p389 = pneg %p88
        %p390 = pneg %p112
        %p391 = pneg %p109
        %p392 = pneg %p133
        %p393 = pneg %p130
        %p394 = pneg %p154
        %p395 = pneg %p151
        %p396 = pneg %p175
        %p397 = pneg %p172
        %p398 = pneg %p196
        %p399 = pneg %p193
        %p400 = pneg %p217
        %p401 = pneg %p214
        %p402 = pneg %p238
        %p403 = pneg %p235
        %p404 = pneg %p270
        %p405 = pneg %p267
        %s406 = sand.u32 %s257, 1
        %s407 = scalar_lea.sflag [#allocation9], %s406
        %s408 = sand.u32 %s257, 1
        %s409 = smul.addr %s408, 8
        %s410 = scalar_lea.vmem [#allocation12], %s409
        %p411 = scmp.lt.s32.totalorder %s34, 7
        %s412 = scalar_select %p411, %s34, 7
        %p413 = scmp.lt.s32.totalorder %s412, 7
        %s414 = scalar_select %p413, %s412, 7
        %s415 = smul.addr %s414, 8
        %s416 = scalar_lea.vmem %s1, %s415
        %p417 = scmp.lt.s32.totalorder %s34, 7
        %s418 = scalar_select %p417, %s34, 7
        %s419 = ssub.s32 %s34, 8
        %p420 = scmp.gt.s32.totalorder %s419, 0
        %s421 = scalar_select %p420, %s419, 0
        %p422 = scmp.lt.s32.totalorder %s421, 7
        %s423 = scalar_select %p422, %s421, 7
        %s424 = smul.addr %s423, 8
        %s425 = scalar_lea.vmem %s2, %s424
        %s426 = ssub.s32 %s34, 8
        %p427 = scmp.gt.s32.totalorder %s426, 0
        %s428 = scalar_select %p427, %s426, 0
        %s429 = sadd.s32 %s34, 4294967289
        %p430 = scmp.gt.s32.totalorder %s429, 0
        %s431 = scalar_select %p430, %s429, 0
        %p432 = scmp.eq.s32.totalorder %s34, 0
        // Predicated region
        $region65: #{seq2seq_forward.1} parent=55 // pred_check
          %p433 = pneg %p432
        $region66: #{seq2seq_forward.1} parent=55 // pred_check_branch
          %435 = sbr.rel (%p433) target = $region68
        $region67: #{seq2seq_forward.1} parent=55 // pred_region
          %436 = vst [vmem:[#allocation2] sm:$0xff] 0.0
          %437 = vst [vmem:[#allocation3] sm:$0xff] 0.0
          %438 = vst [vmem:[%s410] sm:$0xff] 0.0
        $region68: #{seq2seq_forward.1} parent=55 // pred_fallthru
          _
        %p439 = scmp.lt.s32.totalorder %s34, 8
        // Predicated region
        $region69: #{seq2seq_forward.1} parent=55 // pred_check
          %p440 = pneg %p439
        $region70: #{seq2seq_forward.1} parent=55 // pred_check_branch
          %442 = sbr.rel (%p440) target = $region72
        $region71: #{seq2seq_forward.1} parent=55 // pred_region
          %v443 = vld [vmem:[%s416] sm:$0xff]
          %v444 = vld [vmem:[#allocation2] sm:$0xff]
          %v445 = vld [vmem:[#allocation3] sm:$0xff]
          %v446 = vld [vmem:[%s3] sm:$0xff]
          %v447 = vld [vmem:[%s3 + $0x8] sm:$0xff]
          %v448 = vld [vmem:[%s3 + $0x10] sm:$0xff]
          %v449 = vld [vmem:[%s3 + $0x18] sm:$0xff]
          %v450 = vld [vmem:[%s3 + $0x20] sm:$0xff]
          %v451 = vld [vmem:[%s3 + $0x28] sm:$0xff]
          %v452 = vld [vmem:[%s3 + $0x30] sm:$0xff]
          %v453 = vld [vmem:[%s3 + $0x38] sm:$0xff]
          %v454 = vld [vmem:[%s3 + $0x40] sm:$0xff]
          %v455 = vld [vmem:[%s3 + $0x48] sm:$0xff]
          %v456 = vld [vmem:[%s3 + $0x50] sm:$0xff]
          %v457 = vld [vmem:[%s3 + $0x58] sm:$0xff]
          %v458 = vld [vmem:[%s3 + $0x60] sm:$0xff]
          %v459 = vld [vmem:[%s3 + $0x68] sm:$0xff]
          %v460 = vld [vmem:[%s3 + $0x70] sm:$0xff]
          %v461 = vld [vmem:[%s3 + $0x78] sm:$0xff]
          %v462 = vld [vmem:[%s3 + $0x80] sm:$0xff]
          %v463 = vld [vmem:[%s3 + $0x88] sm:$0xff]
          %v464 = vld [vmem:[%s3 + $0x90] sm:$0xff]
          %v465 = vld [vmem:[%s3 + $0x98] sm:$0xff]
          %v466 = vld [vmem:[%s3 + $0xa0] sm:$0xff]
          %v467 = vld [vmem:[%s3 + $0xa8] sm:$0xff]
          %v468 = vld [vmem:[%s3 + $0xb0] sm:$0xff]
          %v469 = vld [vmem:[%s3 + $0xb8] sm:$0xff]
          %v470 = vld [vmem:[%s3 + $0xc0] sm:$0xff]
          %v471 = vld [vmem:[%s3 + $0xc8] sm:$0xff]
          %v472 = vld [vmem:[%s3 + $0xd0] sm:$0xff]
          %v473 = vld [vmem:[%s3 + $0xd8] sm:$0xff]
          %v474 = vld [vmem:[%s3 + $0xe0] sm:$0xff]
          %v475 = vld [vmem:[%s3 + $0xe8] sm:$0xff]
          %v476 = vld [vmem:[%s3 + $0xf0] sm:$0xff]
          %v477 = vld [vmem:[%s3 + $0xf8] sm:$0xff]
          %v478 = vld [vmem:[%s3 + $0x100] sm:$0xff]
          %v479 = vld [vmem:[%s3 + $0x108] sm:$0xff]
          %v480 = vld [vmem:[%s3 + $0x110] sm:$0xff]
          %v481 = vld [vmem:[%s3 + $0x118] sm:$0xff]
          %v482 = vld [vmem:[%s3 + $0x120] sm:$0xff]
          %v483 = vld [vmem:[%s3 + $0x128] sm:$0xff]
          %v484 = vld [vmem:[%s3 + $0x130] sm:$0xff]
          %v485 = vld [vmem:[%s3 + $0x138] sm:$0xff]
          %v486 = vld [vmem:[%s3 + $0x140] sm:$0xff]
          %v487 = vld [vmem:[%s3 + $0x148] sm:$0xff]
          %v488 = vld [vmem:[%s3 + $0x150] sm:$0xff]
          %v489 = vld [vmem:[%s3 + $0x158] sm:$0xff]
          %v490 = vld [vmem:[%s3 + $0x160] sm:$0xff]
          %v491 = vld [vmem:[%s3 + $0x168] sm:$0xff]
          %v492 = vld [vmem:[%s3 + $0x170] sm:$0xff]
          %v493 = vld [vmem:[%s3 + $0x178] sm:$0xff]
          %v494 = vld [vmem:[%s3 + $0x180] sm:$0xff]
          %v495 = vld [vmem:[%s3 + $0x188] sm:$0xff]
          %v496 = vld [vmem:[%s3 + $0x190] sm:$0xff]
          %v497 = vld [vmem:[%s3 + $0x198] sm:$0xff]
          %v498 = vld [vmem:[%s3 + $0x1a0] sm:$0xff]
          %v499 = vld [vmem:[%s3 + $0x1a8] sm:$0xff]
          %v500 = vld [vmem:[%s3 + $0x1b0] sm:$0xff]
          %v501 = vld [vmem:[%s3 + $0x1b8] sm:$0xff]
          %v502 = vld [vmem:[%s3 + $0x1c0] sm:$0xff]
          %v503 = vld [vmem:[%s3 + $0x1c8] sm:$0xff]
          %v504 = vld [vmem:[%s3 + $0x1d0] sm:$0xff]
          %v505 = vld [vmem:[%s3 + $0x1d8] sm:$0xff]
          %v506 = vld [vmem:[%s3 + $0x1e0] sm:$0xff]
          %v507 = vld [vmem:[%s3 + $0x1e8] sm:$0xff]
          %v508 = vld [vmem:[%s3 + $0x1f0] sm:$0xff]
          %v509 = vld [vmem:[%s3 + $0x1f8] sm:$0xff]
          %v510 = vld [vmem:[%s3 + $0x200] sm:$0xff]
          %v511 = vld [vmem:[%s3 + $0x208] sm:$0xff]
          %v512 = vld [vmem:[%s3 + $0x210] sm:$0xff]
          %v513 = vld [vmem:[%s3 + $0x218] sm:$0xff]
          %v514 = vld [vmem:[%s3 + $0x220] sm:$0xff]
          %v515 = vld [vmem:[%s3 + $0x228] sm:$0xff]
          %v516 = vld [vmem:[%s3 + $0x230] sm:$0xff]
          %v517 = vld [vmem:[%s3 + $0x238] sm:$0xff]
          %v518 = vld [vmem:[%s3 + $0x240] sm:$0xff]
          %v519 = vld [vmem:[%s3 + $0x248] sm:$0xff]
          %v520 = vld [vmem:[%s3 + $0x250] sm:$0xff]
          %v521 = vld [vmem:[%s3 + $0x258] sm:$0xff]
          %v522 = vld [vmem:[%s3 + $0x260] sm:$0xff]
          %v523 = vld [vmem:[%s3 + $0x268] sm:$0xff]
          %v524 = vld [vmem:[%s3 + $0x270] sm:$0xff]
          %v525 = vld [vmem:[%s3 + $0x278] sm:$0xff]
          %v526 = vld [vmem:[%s3 + $0x280] sm:$0xff]
          %v527 = vld [vmem:[%s3 + $0x288] sm:$0xff]
          %v528 = vld [vmem:[%s3 + $0x290] sm:$0xff]
          %v529 = vld [vmem:[%s3 + $0x298] sm:$0xff]
          %v530 = vld [vmem:[%s3 + $0x2a0] sm:$0xff]
          %v531 = vld [vmem:[%s3 + $0x2a8] sm:$0xff]
          %v532 = vld [vmem:[%s3 + $0x2b0] sm:$0xff]
          %v533 = vld [vmem:[%s3 + $0x2b8] sm:$0xff]
          %v534 = vld [vmem:[%s3 + $0x2c0] sm:$0xff]
          %v535 = vld [vmem:[%s3 + $0x2c8] sm:$0xff]
          %v536 = vld [vmem:[%s3 + $0x2d0] sm:$0xff]
          %v537 = vld [vmem:[%s3 + $0x2d8] sm:$0xff]
          %v538 = vld [vmem:[%s3 + $0x2e0] sm:$0xff]
          %v539 = vld [vmem:[%s3 + $0x2e8] sm:$0xff]
          %v540 = vld [vmem:[%s3 + $0x2f0] sm:$0xff]
          %v541 = vld [vmem:[%s3 + $0x2f8] sm:$0xff]
          %v542 = vld [vmem:[%s3 + $0x300] sm:$0xff]
          %v543 = vld [vmem:[%s3 + $0x308] sm:$0xff]
          %v544 = vld [vmem:[%s3 + $0x310] sm:$0xff]
          %v545 = vld [vmem:[%s3 + $0x318] sm:$0xff]
          %v546 = vld [vmem:[%s3 + $0x320] sm:$0xff]
          %v547 = vld [vmem:[%s3 + $0x328] sm:$0xff]
          %v548 = vld [vmem:[%s3 + $0x330] sm:$0xff]
          %v549 = vld [vmem:[%s3 + $0x338] sm:$0xff]
          %v550 = vld [vmem:[%s3 + $0x340] sm:$0xff]
          %v551 = vld [vmem:[%s3 + $0x348] sm:$0xff]
          %v552 = vld [vmem:[%s3 + $0x350] sm:$0xff]
          %v553 = vld [vmem:[%s3 + $0x358] sm:$0xff]
          %v554 = vld [vmem:[%s3 + $0x360] sm:$0xff]
          %v555 = vld [vmem:[%s3 + $0x368] sm:$0xff]
          %v556 = vld [vmem:[%s3 + $0x370] sm:$0xff]
          %v557 = vld [vmem:[%s3 + $0x378] sm:$0xff]
          %v558 = vld [vmem:[%s3 + $0x380] sm:$0xff]
          %v559 = vld [vmem:[%s3 + $0x388] sm:$0xff]
          %v560 = vld [vmem:[%s3 + $0x390] sm:$0xff]
          %v561 = vld [vmem:[%s3 + $0x398] sm:$0xff]
          %v562 = vld [vmem:[%s3 + $0x3a0] sm:$0xff]
          %v563 = vld [vmem:[%s3 + $0x3a8] sm:$0xff]
          %v564 = vld [vmem:[%s3 + $0x3b0] sm:$0xff]
          %v565 = vld [vmem:[%s3 + $0x3b8] sm:$0xff]
          %v566 = vld [vmem:[%s3 + $0x3c0] sm:$0xff]
          %v567 = vld [vmem:[%s3 + $0x3c8] sm:$0xff]
          %v568 = vld [vmem:[%s3 + $0x3d0] sm:$0xff]
          %v569 = vld [vmem:[%s3 + $0x3d8] sm:$0xff]
          %v570 = vld [vmem:[%s3 + $0x3e0] sm:$0xff]
          %v571 = vld [vmem:[%s3 + $0x3e8] sm:$0xff]
          %v572 = vld [vmem:[%s3 + $0x3f0] sm:$0xff]
          %v573 = vld [vmem:[%s3 + $0x3f8] sm:$0xff]
          %v574 = vld [vmem:[%s4] sm:$0xf]
          %v576 = vperm.slane %v574, 0
          %v577 = vperm.slane %v574, 1
          %v578 = vperm.slane %v574, 2
          %v579 = vperm.slane %v574, 3
          %584 = vmatpush.msra.mxu0 %v506
          %585 = vmatpush.msra.mxu0 %v502
          %586 = vmatpush.msra.mxu0 %v498
          %587 = vmatpush.msra.mxu0 %v494
          %588 = vmatpush.msra.mxu0 %v490
          %589 = vmatpush.msra.mxu0 %v486
          %590 = vmatpush.msra.mxu0 %v482
          %591 = vmatpush.msra.mxu0 %v478
          %592 = vmatpush.msra.mxu0 %v474
          %593 = vmatpush.msra.mxu0 %v470
          %594 = vmatpush.msra.mxu0 %v466
          %595 = vmatpush.msra.mxu0 %v462
          %596 = vmatpush.msra.mxu0 %v458
          %597 = vmatpush.msra.mxu0 %v454
          %598 = vmatpush.msra.mxu0 %v450
          %599 = vmatpush.msra.mxu0 %v446
          %600 = vmatmul.f32.gmra.mxu0 %v443
          %v601 = vpop.f32.mrf.mxu0
          %v602 = vadd.f32 %v576, %v601
          %603 = vdwg.mxu0
          %604 = vmatpush.msra.mxu0 %v570
          %605 = vmatpush.msra.mxu0 %v566
          %606 = vmatpush.msra.mxu0 %v562
          %607 = vmatpush.msra.mxu0 %v558
          %608 = vmatpush.msra.mxu0 %v554
          %609 = vmatpush.msra.mxu0 %v550
          %610 = vmatpush.msra.mxu0 %v546
          %611 = vmatpush.msra.mxu0 %v542
          %612 = vmatpush.msra.mxu0 %v538
          %613 = vmatpush.msra.mxu0 %v534
          %614 = vmatpush.msra.mxu0 %v530
          %615 = vmatpush.msra.mxu0 %v526
          %616 = vmatpush.msra.mxu0 %v522
          %617 = vmatpush.msra.mxu0 %v518
          %618 = vmatpush.msra.mxu0 %v514
          %619 = vmatpush.msra.mxu0 %v510
          %620 = vmatmul.f32.gmra.mxu0 %v444
          %v621 = vpop.f32.mrf.mxu0
          %v622 = vadd.f32 %v602, %v621
          %623 = vdwg.mxu0
          %624 = vmatpush.msra.mxu0 %v507
          %625 = vmatpush.msra.mxu0 %v503
          %626 = vmatpush.msra.mxu0 %v499
          %627 = vmatpush.msra.mxu0 %v495
          %628 = vmatpush.msra.mxu0 %v491
          %629 = vmatpush.msra.mxu0 %v487
          %630 = vmatpush.msra.mxu0 %v483
          %631 = vmatpush.msra.mxu0 %v479
          %632 = vmatpush.msra.mxu0 %v475
          %633 = vmatpush.msra.mxu0 %v471
          %634 = vmatpush.msra.mxu0 %v467
          %635 = vmatpush.msra.mxu0 %v463
          %636 = vmatpush.msra.mxu0 %v459
          %637 = vmatpush.msra.mxu0 %v455
          %638 = vmatpush.msra.mxu0 %v451
          %639 = vmatpush.msra.mxu0 %v447
          %640 = vmatmul.f32.gmra.mxu0 %v443
          %v641 = vpop.f32.mrf.mxu0
          %v642 = vadd.f32 %v577, %v641
          %643 = vdwg.mxu0
          %644 = vmatpush.msra.mxu0 %v571
          %645 = vmatpush.msra.mxu0 %v567
          %646 = vmatpush.msra.mxu0 %v563
          %647 = vmatpush.msra.mxu0 %v559
          %648 = vmatpush.msra.mxu0 %v555
          %649 = vmatpush.msra.mxu0 %v551
          %650 = vmatpush.msra.mxu0 %v547
          %651 = vmatpush.msra.mxu0 %v543
          %652 = vmatpush.msra.mxu0 %v539
          %653 = vmatpush.msra.mxu0 %v535
          %654 = vmatpush.msra.mxu0 %v531
          %655 = vmatpush.msra.mxu0 %v527
          %656 = vmatpush.msra.mxu0 %v523
          %657 = vmatpush.msra.mxu0 %v519
          %658 = vmatpush.msra.mxu0 %v515
          %659 = vmatpush.msra.mxu0 %v511
          %660 = vmatmul.f32.gmra.mxu0 %v444
          %v661 = vpop.f32.mrf.mxu0
          %v662 = vadd.f32 %v642, %v661
          %663 = vdwg.mxu0
          %664 = vmatpush.msra.mxu0 %v508
          %665 = vmatpush.msra.mxu0 %v504
          %666 = vmatpush.msra.mxu0 %v500
          %667 = vmatpush.msra.mxu0 %v496
          %668 = vmatpush.msra.mxu0 %v492
          %669 = vmatpush.msra.mxu0 %v488
          %670 = vmatpush.msra.mxu0 %v484
          %671 = vmatpush.msra.mxu0 %v480
          %672 = vmatpush.msra.mxu0 %v476
          %673 = vmatpush.msra.mxu0 %v472
          %674 = vmatpush.msra.mxu0 %v468
          %675 = vmatpush.msra.mxu0 %v464
          %676 = vmatpush.msra.mxu0 %v460
          %677 = vmatpush.msra.mxu0 %v456
          %678 = vmatpush.msra.mxu0 %v452
          %679 = vmatpush.msra.mxu0 %v448
          %680 = vmatmul.f32.gmra.mxu0 %v443
          %v681 = vpop.f32.mrf.mxu0
          %v682 = vadd.f32 %v578, %v681
          %683 = vdwg.mxu0
          %684 = vmatpush.msra.mxu0 %v572
          %685 = vmatpush.msra.mxu0 %v568
          %686 = vmatpush.msra.mxu0 %v564
          %687 = vmatpush.msra.mxu0 %v560
          %688 = vmatpush.msra.mxu0 %v556
          %689 = vmatpush.msra.mxu0 %v552
          %690 = vmatpush.msra.mxu0 %v548
          %691 = vmatpush.msra.mxu0 %v544
          %692 = vmatpush.msra.mxu0 %v540
          %693 = vmatpush.msra.mxu0 %v536
          %694 = vmatpush.msra.mxu0 %v532
          %695 = vmatpush.msra.mxu0 %v528
          %696 = vmatpush.msra.mxu0 %v524
          %697 = vmatpush.msra.mxu0 %v520
          %698 = vmatpush.msra.mxu0 %v516
          %699 = vmatpush.msra.mxu0 %v512
          %700 = vmatmul.f32.gmra.mxu0 %v444
          %v701 = vpop.f32.mrf.mxu0
          %v702 = vadd.f32 %v682, %v701
          %703 = vdwg.mxu0
          %704 = vmatpush.msra.mxu0 %v509
          %705 = vmatpush.msra.mxu0 %v505
          %706 = vmatpush.msra.mxu0 %v501
          %707 = vmatpush.msra.mxu0 %v497
          %708 = vmatpush.msra.mxu0 %v493
          %709 = vmatpush.msra.mxu0 %v489
          %710 = vmatpush.msra.mxu0 %v485
          %711 = vmatpush.msra.mxu0 %v481
          %712 = vmatpush.msra.mxu0 %v477
          %713 = vmatpush.msra.mxu0 %v473
          %714 = vmatpush.msra.mxu0 %v469
          %715 = vmatpush.msra.mxu0 %v465
          %716 = vmatpush.msra.mxu0 %v461
          %717 = vmatpush.msra.mxu0 %v457
          %718 = vmatpush.msra.mxu0 %v453
          %719 = vmatpush.msra.mxu0 %v449
          %720 = vmatmul.f32.gmra.mxu0 %v443
          %v721 = vpop.f32.mrf.mxu0
          %v722 = vadd.f32 %v579, %v721
          %723 = vdwg.mxu0
          %724 = vmatpush.msra.mxu0 %v573
          %725 = vmatpush.msra.mxu0 %v569
          %726 = vmatpush.msra.mxu0 %v565
          %727 = vmatpush.msra.mxu0 %v561
          %728 = vmatpush.msra.mxu0 %v557
          %729 = vmatpush.msra.mxu0 %v553
          %730 = vmatpush.msra.mxu0 %v549
          %731 = vmatpush.msra.mxu0 %v545
          %732 = vmatpush.msra.mxu0 %v541
          %733 = vmatpush.msra.mxu0 %v537
          %734 = vmatpush.msra.mxu0 %v533
          %735 = vmatpush.msra.mxu0 %v529
          %736 = vmatpush.msra.mxu0 %v525
          %737 = vmatpush.msra.mxu0 %v521
          %738 = vmatpush.msra.mxu0 %v517
          %739 = vmatpush.msra.mxu0 %v513
          %740 = vmatmul.f32.gmra.mxu0 %v444
          %v741 = vpop.f32.mrf.mxu0
          %v742 = vadd.f32 %v722, %v741
          %743 = vdwg.mxu0
          %v744 = vxor.u32 %v622, 2147483648
          %v745 = vmul.f32 %v744, 1.442695
          %v746 = vpow.pop %v745
          %v747 = vadd.f32 %v746, 1.0
          %v748 = vrcp.pop %v747
          %v749 = vmul.f32 %v747, %v748
          %v750 = vsub.f32 1.0, %v749
          %v751 = vmul.f32 %v748, %v750
          %v752 = vadd.f32 %v748, %v751
          %vm753 = vweird.f32 %v747
          %vm754 = vweird.f32 %v748
          %vm755 = vmor %vm753, %vm754
          %v756 = vsel %vm755, %v748, %v752
          %v757 = vand.u32 2147483647, %v747
          %vm758 = vcmp.eq.f32.partialorder %v757, 8.507059e+37
          %v759 = vand.u32 %v747, 2147483648
          %v760 = vor.u32 1.1754944e-38, %v759
          %v761 = vsel %vm758, %v760, %v756
          %v762 = vmul.f32 1.0, %v761
          %v763 = vxor.u32 %v662, 2147483648
          %v764 = vmul.f32 %v763, 1.442695
          %v765 = vpow.pop %v764
          %v766 = vadd.f32 %v765, 1.0
          %v767 = vrcp.pop %v766
          %v768 = vmul.f32 %v766, %v767
          %v769 = vsub.f32 1.0, %v768
          %v770 = vmul.f32 %v767, %v769
          %v771 = vadd.f32 %v767, %v770
          %vm772 = vweird.f32 %v766
          %vm773 = vweird.f32 %v767
          %vm774 = vmor %vm772, %vm773
          %v775 = vsel %vm774, %v767, %v771
          %v776 = vand.u32 2147483647, %v766
          %vm777 = vcmp.eq.f32.partialorder %v776, 8.507059e+37
          %v778 = vand.u32 %v766, 2147483648
          %v779 = vor.u32 1.1754944e-38, %v778
          %v780 = vsel %vm777, %v779, %v775
          %v781 = vmul.f32 1.0, %v780
          %v782 = vtanh.pop %v702
          %v783 = vxor.u32 %v742, 2147483648
          %v784 = vmul.f32 %v783, 1.442695
          %v785 = vpow.pop %v784
          %v786 = vadd.f32 %v785, 1.0
          %v787 = vrcp.pop %v786
          %v788 = vmul.f32 %v786, %v787
          %v789 = vsub.f32 1.0, %v788
          %v790 = vmul.f32 %v787, %v789
          %v791 = vadd.f32 %v787, %v790
          %vm792 = vweird.f32 %v786
          %vm793 = vweird.f32 %v787
          %vm794 = vmor %vm792, %vm793
          %v795 = vsel %vm794, %v787, %v791
          %v796 = vand.u32 2147483647, %v786
          %vm797 = vcmp.eq.f32.partialorder %v796, 8.507059e+37
          %v798 = vand.u32 %v786, 2147483648
          %v799 = vor.u32 1.1754944e-38, %v798
          %v800 = vsel %vm797, %v799, %v795
          %v801 = vmul.f32 1.0, %v800
          %v802 = vmul.f32 %v781, %v445
          %v803 = vmul.f32 %v762, %v782
          %v804 = vadd.f32 %v802, %v803
          %v805 = vtanh.pop %v804
          %v806 = vmul.f32 %v801, %v805
          %807 = vst [vmem:[#allocation2] sm:$0xff] %v806
          %808 = vst [vmem:[#allocation3] sm:$0xff] %v804
        $region72: #{seq2seq_forward.1} parent=55 // pred_fallthru
          _
        %p809 = scmp.ge.s32.totalorder %s34, 8
        // Predicated region
        $region73: #{seq2seq_forward.1} parent=55 // pred_check
          %p810 = pneg %p809
        $region74: #{seq2seq_forward.1} parent=55 // pred_check_branch
          %812 = sbr.rel (%p810) target = $region76
        $region75: #{seq2seq_forward.1} parent=55 // pred_region
          %s813 = ssub.s32 %s34, 8
          %s814 = ssub.s32 %s34, 9
          %p815 = scmp.gt.s32.totalorder %s814, 0
          %s816 = scalar_select %p815, %s814, 0
          %s817 = sld [smem:[#allocation6 + %s816]]
          %p818 = scmp.eq.s32.totalorder %s813, 0
          %p819 = scmp.eq.s32.totalorder %s817, 1
          %p820 = por %p818, %p819
          // Predicated region
          $region77: #{seq2seq_forward.1} parent=75 // pred_check
            %p821 = pneg %p820
          $region78: #{seq2seq_forward.1} parent=75 // pred_check_branch
            %823 = sbr.rel (%p821) target = $region80
          $region79: #{seq2seq_forward.1} parent=75 // pred_region
            %v824 = vld [vmem:[%s425] sm:$0xff]
            %825 = vst [vmem:[#allocation4] sm:$0xff] %v824
          $region80: #{seq2seq_forward.1} parent=75 // pred_fallthru
            _
          %v826 = vld [vmem:[#allocation4] sm:$0xff]
          %v827 = vld [vmem:[#allocation2] sm:$0xff]
          %v828 = vld [vmem:[#allocation3] sm:$0xff]
          %v829 = vld [vmem:[#allocation7] sm:$0xff]
          %v830 = vld [vmem:[#allocation7 + $0x8] sm:$0xff]
          %v831 = vld [vmem:[#allocation7 + $0x10] sm:$0xff]
          %v832 = vld [vmem:[#allocation7 + $0x18] sm:$0xff]
          %v833 = vld [vmem:[#allocation7 + $0x20] sm:$0xff]
          %v834 = vld [vmem:[#allocation7 + $0x28] sm:$0xff]
          %v835 = vld [vmem:[#allocation7 + $0x30] sm:$0xff]
          %v836 = vld [vmem:[#allocation7 + $0x38] sm:$0xff]
          %v837 = vld [vmem:[#allocation7 + $0x40] sm:$0xff]
          %v838 = vld [vmem:[#allocation7 + $0x48] sm:$0xff]
          %v839 = vld [vmem:[#allocation7 + $0x50] sm:$0xff]
          %v840 = vld [vmem:[#allocation7 + $0x58] sm:$0xff]
          %v841 = vld [vmem:[#allocation7 + $0x60] sm:$0xff]
          %v842 = vld [vmem:[#allocation7 + $0x68] sm:$0xff]
          %v843 = vld [vmem:[#allocation7 + $0x70] sm:$0xff]
          %v844 = vld [vmem:[#allocation7 + $0x78] sm:$0xff]
          %v845 = vld [vmem:[#allocation7 + $0x80] sm:$0xff]
          %v846 = vld [vmem:[#allocation7 + $0x88] sm:$0xff]
          %v847 = vld [vmem:[#allocation7 + $0x90] sm:$0xff]
          %v848 = vld [vmem:[#allocation7 + $0x98] sm:$0xff]
          %v849 = vld [vmem:[#allocation7 + $0xa0] sm:$0xff]
          %v850 = vld [vmem:[#allocation7 + $0xa8] sm:$0xff]
          %v851 = vld [vmem:[#allocation7 + $0xb0] sm:$0xff]
          %v852 = vld [vmem:[#allocation7 + $0xb8] sm:$0xff]
          %v853 = vld [vmem:[#allocation7 + $0xc0] sm:$0xff]
          %v854 = vld [vmem:[#allocation7 + $0xc8] sm:$0xff]
          %v855 = vld [vmem:[#allocation7 + $0xd0] sm:$0xff]
          %v856 = vld [vmem:[#allocation7 + $0xd8] sm:$0xff]
          %v857 = vld [vmem:[#allocation7 + $0xe0] sm:$0xff]
          %v858 = vld [vmem:[#allocation7 + $0xe8] sm:$0xff]
          %v859 = vld [vmem:[#allocation7 + $0xf0] sm:$0xff]
          %v860 = vld [vmem:[#allocation7 + $0xf8] sm:$0xff]
          %v861 = vld [vmem:[#allocation7 + $0x100] sm:$0xff]
          %v862 = vld [vmem:[#allocation7 + $0x108] sm:$0xff]
          %v863 = vld [vmem:[#allocation7 + $0x110] sm:$0xff]
          %v864 = vld [vmem:[#allocation7 + $0x118] sm:$0xff]
          %v865 = vld [vmem:[#allocation7 + $0x120] sm:$0xff]
          %v866 = vld [vmem:[#allocation7 + $0x128] sm:$0xff]
          %v867 = vld [vmem:[#allocation7 + $0x130] sm:$0xff]
          %v868 = vld [vmem:[#allocation7 + $0x138] sm:$0xff]
          %v869 = vld [vmem:[#allocation7 + $0x140] sm:$0xff]
          %v870 = vld [vmem:[#allocation7 + $0x148] sm:$0xff]
          %v871 = vld [vmem:[#allocation7 + $0x150] sm:$0xff]
          %v872 = vld [vmem:[#allocation7 + $0x158] sm:$0xff]
          %v873 = vld [vmem:[#allocation7 + $0x160] sm:$0xff]
          %v874 = vld [vmem:[#allocation7 + $0x168] sm:$0xff]
          %v875 = vld [vmem:[#allocation7 + $0x170] sm:$0xff]
          %v876 = vld [vmem:[#allocation7 + $0x178] sm:$0xff]
          %v877 = vld [vmem:[#allocation7 + $0x180] sm:$0xff]
          %v878 = vld [vmem:[#allocation7 + $0x188] sm:$0xff]
          %v879 = vld [vmem:[#allocation7 + $0x190] sm:$0xff]
          %v880 = vld [vmem:[#allocation7 + $0x198] sm:$0xff]
          %v881 = vld [vmem:[#allocation7 + $0x1a0] sm:$0xff]
          %v882 = vld [vmem:[#allocation7 + $0x1a8] sm:$0xff]
          %v883 = vld [vmem:[#allocation7 + $0x1b0] sm:$0xff]
          %v884 = vld [vmem:[#allocation7 + $0x1b8] sm:$0xff]
          %v885 = vld [vmem:[#allocation7 + $0x1c0] sm:$0xff]
          %v886 = vld [vmem:[#allocation7 + $0x1c8] sm:$0xff]
          %v887 = vld [vmem:[#allocation7 + $0x1d0] sm:$0xff]
          %v888 = vld [vmem:[#allocation7 + $0x1d8] sm:$0xff]
          %v889 = vld [vmem:[#allocation7 + $0x1e0] sm:$0xff]
          %v890 = vld [vmem:[#allocation7 + $0x1e8] sm:$0xff]
          %v891 = vld [vmem:[#allocation7 + $0x1f0] sm:$0xff]
          %v892 = vld [vmem:[#allocation7 + $0x1f8] sm:$0xff]
          %v893 = vld [vmem:[#allocation7 + $0x200] sm:$0xff]
          %v894 = vld [vmem:[#allocation7 + $0x208] sm:$0xff]
          %v895 = vld [vmem:[#allocation7 + $0x210] sm:$0xff]
          %v896 = vld [vmem:[#allocation7 + $0x218] sm:$0xff]
          %v897 = vld [vmem:[#allocation7 + $0x220] sm:$0xff]
          %v898 = vld [vmem:[#allocation7 + $0x228] sm:$0xff]
          %v899 = vld [vmem:[#allocation7 + $0x230] sm:$0xff]
          %v900 = vld [vmem:[#allocation7 + $0x238] sm:$0xff]
          %v901 = vld [vmem:[#allocation7 + $0x240] sm:$0xff]
          %v902 = vld [vmem:[#allocation7 + $0x248] sm:$0xff]
          %v903 = vld [vmem:[#allocation7 + $0x250] sm:$0xff]
          %v904 = vld [vmem:[#allocation7 + $0x258] sm:$0xff]
          %v905 = vld [vmem:[#allocation7 + $0x260] sm:$0xff]
          %v906 = vld [vmem:[#allocation7 + $0x268] sm:$0xff]
          %v907 = vld [vmem:[#allocation7 + $0x270] sm:$0xff]
          %v908 = vld [vmem:[#allocation7 + $0x278] sm:$0xff]
          %v909 = vld [vmem:[#allocation7 + $0x280] sm:$0xff]
          %v910 = vld [vmem:[#allocation7 + $0x288] sm:$0xff]
          %v911 = vld [vmem:[#allocation7 + $0x290] sm:$0xff]
          %v912 = vld [vmem:[#allocation7 + $0x298] sm:$0xff]
          %v913 = vld [vmem:[#allocation7 + $0x2a0] sm:$0xff]
          %v914 = vld [vmem:[#allocation7 + $0x2a8] sm:$0xff]
          %v915 = vld [vmem:[#allocation7 + $0x2b0] sm:$0xff]
          %v916 = vld [vmem:[#allocation7 + $0x2b8] sm:$0xff]
          %v917 = vld [vmem:[#allocation7 + $0x2c0] sm:$0xff]
          %v918 = vld [vmem:[#allocation7 + $0x2c8] sm:$0xff]
          %v919 = vld [vmem:[#allocation7 + $0x2d0] sm:$0xff]
          %v920 = vld [vmem:[#allocation7 + $0x2d8] sm:$0xff]
          %v921 = vld [vmem:[#allocation7 + $0x2e0] sm:$0xff]
          %v922 = vld [vmem:[#allocation7 + $0x2e8] sm:$0xff]
          %v923 = vld [vmem:[#allocation7 + $0x2f0] sm:$0xff]
          %v924 = vld [vmem:[#allocation7 + $0x2f8] sm:$0xff]
          %v925 = vld [vmem:[#allocation7 + $0x300] sm:$0xff]
          %v926 = vld [vmem:[#allocation7 + $0x308] sm:$0xff]
          %v927 = vld [vmem:[#allocation7 + $0x310] sm:$0xff]
          %v928 = vld [vmem:[#allocation7 + $0x318] sm:$0xff]
          %v929 = vld [vmem:[#allocation7 + $0x320] sm:$0xff]
          %v930 = vld [vmem:[#allocation7 + $0x328] sm:$0xff]
          %v931 = vld [vmem:[#allocation7 + $0x330] sm:$0xff]
          %v932 = vld [vmem:[#allocation7 + $0x338] sm:$0xff]
          %v933 = vld [vmem:[#allocation7 + $0x340] sm:$0xff]
          %v934 = vld [vmem:[#allocation7 + $0x348] sm:$0xff]
          %v935 = vld [vmem:[#allocation7 + $0x350] sm:$0xff]
          %v936 = vld [vmem:[#allocation7 + $0x358] sm:$0xff]
          %v937 = vld [vmem:[#allocation7 + $0x360] sm:$0xff]
          %v938 = vld [vmem:[#allocation7 + $0x368] sm:$0xff]
          %v939 = vld [vmem:[#allocation7 + $0x370] sm:$0xff]
          %v940 = vld [vmem:[#allocation7 + $0x378] sm:$0xff]
          %v941 = vld [vmem:[#allocation7 + $0x380] sm:$0xff]
          %v942 = vld [vmem:[#allocation7 + $0x388] sm:$0xff]
          %v943 = vld [vmem:[#allocation7 + $0x390] sm:$0xff]
          %v944 = vld [vmem:[#allocation7 + $0x398] sm:$0xff]
          %v945 = vld [vmem:[#allocation7 + $0x3a0] sm:$0xff]
          %v946 = vld [vmem:[#allocation7 + $0x3a8] sm:$0xff]
          %v947 = vld [vmem:[#allocation7 + $0x3b0] sm:$0xff]
          %v948 = vld [vmem:[#allocation7 + $0x3b8] sm:$0xff]
          %v949 = vld [vmem:[#allocation7 + $0x3c0] sm:$0xff]
          %v950 = vld [vmem:[#allocation7 + $0x3c8] sm:$0xff]
          %v951 = vld [vmem:[#allocation7 + $0x3d0] sm:$0xff]
          %v952 = vld [vmem:[#allocation7 + $0x3d8] sm:$0xff]
          %v953 = vld [vmem:[#allocation7 + $0x3e0] sm:$0xff]
          %v954 = vld [vmem:[#allocation7 + $0x3e8] sm:$0xff]
          %v955 = vld [vmem:[#allocation7 + $0x3f0] sm:$0xff]
          %v956 = vld [vmem:[#allocation7 + $0x3f8] sm:$0xff]
          %v957 = vld [vmem:[%s6] sm:$0xf]
          %v959 = vperm.slane %v957, 0
          %v960 = vperm.slane %v957, 1
          %v961 = vperm.slane %v957, 2
          %v962 = vperm.slane %v957, 3
          %967 = vmatpush.msra.mxu0 %v889
          %968 = vmatpush.msra.mxu0 %v885
          %969 = vmatpush.msra.mxu0 %v881
          %970 = vmatpush.msra.mxu0 %v877
          %971 = vmatpush.msra.mxu0 %v873
          %972 = vmatpush.msra.mxu0 %v869
          %973 = vmatpush.msra.mxu0 %v865
          %974 = vmatpush.msra.mxu0 %v861
          %975 = vmatpush.msra.mxu0 %v857
          %976 = vmatpush.msra.mxu0 %v853
          %977 = vmatpush.msra.mxu0 %v849
          %978 = vmatpush.msra.mxu0 %v845
          %979 = vmatpush.msra.mxu0 %v841
          %980 = vmatpush.msra.mxu0 %v837
          %981 = vmatpush.msra.mxu0 %v833
          %982 = vmatpush.msra.mxu0 %v829
          %983 = vmatmul.f32.gmra.mxu0 %v826
          %v984 = vpop.f32.mrf.mxu0
          %v985 = vadd.f32 %v959, %v984
          %986 = vdwg.mxu0
          %987 = vmatpush.msra.mxu0 %v953
          %988 = vmatpush.msra.mxu0 %v949
          %989 = vmatpush.msra.mxu0 %v945
          %990 = vmatpush.msra.mxu0 %v941
          %991 = vmatpush.msra.mxu0 %v937
          %992 = vmatpush.msra.mxu0 %v933
          %993 = vmatpush.msra.mxu0 %v929
          %994 = vmatpush.msra.mxu0 %v925
          %995 = vmatpush.msra.mxu0 %v921
          %996 = vmatpush.msra.mxu0 %v917
          %997 = vmatpush.msra.mxu0 %v913
          %998 = vmatpush.msra.mxu0 %v909
          %999 = vmatpush.msra.mxu0 %v905
          %1000 = vmatpush.msra.mxu0 %v901
          %1001 = vmatpush.msra.mxu0 %v897
          %1002 = vmatpush.msra.mxu0 %v893
          %1003 = vmatmul.f32.gmra.mxu0 %v827
          %v1004 = vpop.f32.mrf.mxu0
          %v1005 = vadd.f32 %v985, %v1004
          %1006 = vdwg.mxu0
          %1007 = vmatpush.msra.mxu0 %v890
          %1008 = vmatpush.msra.mxu0 %v886
          %1009 = vmatpush.msra.mxu0 %v882
          %1010 = vmatpush.msra.mxu0 %v878
          %1011 = vmatpush.msra.mxu0 %v874
          %1012 = vmatpush.msra.mxu0 %v870
          %1013 = vmatpush.msra.mxu0 %v866
          %1014 = vmatpush.msra.mxu0 %v862
          %1015 = vmatpush.msra.mxu0 %v858
          %1016 = vmatpush.msra.mxu0 %v854
          %1017 = vmatpush.msra.mxu0 %v850
          %1018 = vmatpush.msra.mxu0 %v846
          %1019 = vmatpush.msra.mxu0 %v842
          %1020 = vmatpush.msra.mxu0 %v838
          %1021 = vmatpush.msra.mxu0 %v834
          %1022 = vmatpush.msra.mxu0 %v830
          %1023 = vmatmul.f32.gmra.mxu0 %v826
          %v1024 = vpop.f32.mrf.mxu0
          %v1025 = vadd.f32 %v960, %v1024
          %1026 = vdwg.mxu0
          %1027 = vmatpush.msra.mxu0 %v954
          %1028 = vmatpush.msra.mxu0 %v950
          %1029 = vmatpush.msra.mxu0 %v946
          %1030 = vmatpush.msra.mxu0 %v942
          %1031 = vmatpush.msra.mxu0 %v938
          %1032 = vmatpush.msra.mxu0 %v934
          %1033 = vmatpush.msra.mxu0 %v930
          %1034 = vmatpush.msra.mxu0 %v926
          %1035 = vmatpush.msra.mxu0 %v922
          %1036 = vmatpush.msra.mxu0 %v918
          %1037 = vmatpush.msra.mxu0 %v914
          %1038 = vmatpush.msra.mxu0 %v910
          %1039 = vmatpush.msra.mxu0 %v906
          %1040 = vmatpush.msra.mxu0 %v902
          %1041 = vmatpush.msra.mxu0 %v898
          %1042 = vmatpush.msra.mxu0 %v894
          %1043 = vmatmul.f32.gmra.mxu0 %v827
          %v1044 = vpop.f32.mrf.mxu0
          %v1045 = vadd.f32 %v1025, %v1044
          %1046 = vdwg.mxu0
          %1047 = vmatpush.msra.mxu0 %v891
          %1048 = vmatpush.msra.mxu0 %v887
          %1049 = vmatpush.msra.mxu0 %v883
          %1050 = vmatpush.msra.mxu0 %v879
          %1051 = vmatpush.msra.mxu0 %v875
          %1052 = vmatpush.msra.mxu0 %v871
          %1053 = vmatpush.msra.mxu0 %v867
          %1054 = vmatpush.msra.mxu0 %v863
          %1055 = vmatpush.msra.mxu0 %v859
          %1056 = vmatpush.msra.mxu0 %v855
          %1057 = vmatpush.msra.mxu0 %v851
          %1058 = vmatpush.msra.mxu0 %v847
          %1059 = vmatpush.msra.mxu0 %v843
          %1060 = vmatpush.msra.mxu0 %v839
          %1061 = vmatpush.msra.mxu0 %v835
          %1062 = vmatpush.msra.mxu0 %v831
          %1063 = vmatmul.f32.gmra.mxu0 %v826
          %v1064 = vpop.f32.mrf.mxu0
          %v1065 = vadd.f32 %v961, %v1064
          %1066 = vdwg.mxu0
          %1067 = vmatpush.msra.mxu0 %v955
          %1068 = vmatpush.msra.mxu0 %v951
          %1069 = vmatpush.msra.mxu0 %v947
          %1070 = vmatpush.msra.mxu0 %v943
          %1071 = vmatpush.msra.mxu0 %v939
          %1072 = vmatpush.msra.mxu0 %v935
          %1073 = vmatpush.msra.mxu0 %v931
          %1074 = vmatpush.msra.mxu0 %v927
          %1075 = vmatpush.msra.mxu0 %v923
          %1076 = vmatpush.msra.mxu0 %v919
          %1077 = vmatpush.msra.mxu0 %v915
          %1078 = vmatpush.msra.mxu0 %v911
          %1079 = vmatpush.msra.mxu0 %v907
          %1080 = vmatpush.msra.mxu0 %v903
          %1081 = vmatpush.msra.mxu0 %v899
          %1082 = vmatpush.msra.mxu0 %v895
          %1083 = vmatmul.f32.gmra.mxu0 %v827
          %v1084 = vpop.f32.mrf.mxu0
          %v1085 = vadd.f32 %v1065, %v1084
          %1086 = vdwg.mxu0
          %1087 = vmatpush.msra.mxu0 %v892
          %1088 = vmatpush.msra.mxu0 %v888
          %1089 = vmatpush.msra.mxu0 %v884
          %1090 = vmatpush.msra.mxu0 %v880
          %1091 = vmatpush.msra.mxu0 %v876
          %1092 = vmatpush.msra.mxu0 %v872
          %1093 = vmatpush.msra.mxu0 %v868
          %1094 = vmatpush.msra.mxu0 %v864
          %1095 = vmatpush.msra.mxu0 %v860
          %1096 = vmatpush.msra.mxu0 %v856
          %1097 = vmatpush.msra.mxu0 %v852
          %1098 = vmatpush.msra.mxu0 %v848
          %1099 = vmatpush.msra.mxu0 %v844
          %1100 = vmatpush.msra.mxu0 %v840
          %1101 = vmatpush.msra.mxu0 %v836
          %1102 = vmatpush.msra.mxu0 %v832
          %1103 = vmatmul.f32.gmra.mxu0 %v826
          %v1104 = vpop.f32.mrf.mxu0
          %v1105 = vadd.f32 %v962, %v1104
          %1106 = vdwg.mxu0
          %1107 = vmatpush.msra.mxu0 %v956
          %1108 = vmatpush.msra.mxu0 %v952
          %1109 = vmatpush.msra.mxu0 %v948
          %1110 = vmatpush.msra.mxu0 %v944
          %1111 = vmatpush.msra.mxu0 %v940
          %1112 = vmatpush.msra.mxu0 %v936
          %1113 = vmatpush.msra.mxu0 %v932
          %1114 = vmatpush.msra.mxu0 %v928
          %1115 = vmatpush.msra.mxu0 %v924
          %1116 = vmatpush.msra.mxu0 %v920
          %1117 = vmatpush.msra.mxu0 %v916
          %1118 = vmatpush.msra.mxu0 %v912
          %1119 = vmatpush.msra.mxu0 %v908
          %1120 = vmatpush.msra.mxu0 %v904
          %1121 = vmatpush.msra.mxu0 %v900
          %1122 = vmatpush.msra.mxu0 %v896
          %1123 = vmatmul.f32.gmra.mxu0 %v827
          %v1124 = vpop.f32.mrf.mxu0
          %v1125 = vadd.f32 %v1105, %v1124
          %1126 = vdwg.mxu0
          %v1127 = vxor.u32 %v1005, 2147483648
          %v1128 = vmul.f32 %v1127, 1.442695
          %v1129 = vpow.pop %v1128
          %v1130 = vadd.f32 %v1129, 1.0
          %v1131 = vrcp.pop %v1130
          %v1132 = vmul.f32 %v1130, %v1131
          %v1133 = vsub.f32 1.0, %v1132
          %v1134 = vmul.f32 %v1131, %v1133
          %v1135 = vadd.f32 %v1131, %v1134
          %vm1136 = vweird.f32 %v1130
          %vm1137 = vweird.f32 %v1131
          %vm1138 = vmor %vm1136, %vm1137
          %v1139 = vsel %vm1138, %v1131, %v1135
          %v1140 = vand.u32 2147483647, %v1130
          %vm1141 = vcmp.eq.f32.partialorder %v1140, 8.507059e+37
          %v1142 = vand.u32 %v1130, 2147483648
          %v1143 = vor.u32 1.1754944e-38, %v1142
          %v1144 = vsel %vm1141, %v1143, %v1139
          %v1145 = vmul.f32 1.0, %v1144
          %v1146 = vxor.u32 %v1045, 2147483648
          %v1147 = vmul.f32 %v1146, 1.442695
          %v1148 = vpow.pop %v1147
          %v1149 = vadd.f32 %v1148, 1.0
          %v1150 = vrcp.pop %v1149
          %v1151 = vmul.f32 %v1149, %v1150
          %v1152 = vsub.f32 1.0, %v1151
          %v1153 = vmul.f32 %v1150, %v1152
          %v1154 = vadd.f32 %v1150, %v1153
          %vm1155 = vweird.f32 %v1149
          %vm1156 = vweird.f32 %v1150
          %vm1157 = vmor %vm1155, %vm1156
          %v1158 = vsel %vm1157, %v1150, %v1154
          %v1159 = vand.u32 2147483647, %v1149
          %vm1160 = vcmp.eq.f32.partialorder %v1159, 8.507059e+37
          %v1161 = vand.u32 %v1149, 2147483648
          %v1162 = vor.u32 1.1754944e-38, %v1161
          %v1163 = vsel %vm1160, %v1162, %v1158
          %v1164 = vmul.f32 1.0, %v1163
          %v1165 = vtanh.pop %v1085
          %v1166 = vxor.u32 %v1125, 2147483648
          %v1167 = vmul.f32 %v1166, 1.442695
          %v1168 = vpow.pop %v1167
          %v1169 = vadd.f32 %v1168, 1.0
          %v1170 = vrcp.pop %v1169
          %v1171 = vmul.f32 %v1169, %v1170
          %v1172 = vsub.f32 1.0, %v1171
          %v1173 = vmul.f32 %v1170, %v1172
          %v1174 = vadd.f32 %v1170, %v1173
          %vm1175 = vweird.f32 %v1169
          %vm1176 = vweird.f32 %v1170
          %vm1177 = vmor %vm1175, %vm1176
          %v1178 = vsel %vm1177, %v1170, %v1174
          %v1179 = vand.u32 2147483647, %v1169
          %vm1180 = vcmp.eq.f32.partialorder %v1179, 8.507059e+37
          %v1181 = vand.u32 %v1169, 2147483648
          %v1182 = vor.u32 1.1754944e-38, %v1181
          %v1183 = vsel %vm1180, %v1182, %v1178
          %v1184 = vmul.f32 1.0, %v1183
          %v1185 = vmul.f32 %v1164, %v828
          %v1186 = vmul.f32 %v1145, %v1165
          %v1187 = vadd.f32 %v1185, %v1186
          %v1188 = vtanh.pop %v1187
          %v1189 = vmul.f32 %v1184, %v1188
          %1190 = vst [vmem:[#allocation2] sm:$0xff] %v1189
          %1191 = vst [vmem:[#allocation3] sm:$0xff] %v1187
          %v1192 = vld [vmem:[#allocation10] sm:$0xff]
          %v1193 = vld [vmem:[#allocation10 + $0x8] sm:$0xff]
          %v1194 = vld [vmem:[#allocation10 + $0x10] sm:$0xff]
          %v1195 = vld [vmem:[#allocation10 + $0x18] sm:$0xff]
          %v1196 = vld [vmem:[#allocation10 + $0x20] sm:$0xff]
          %v1197 = vld [vmem:[#allocation10 + $0x28] sm:$0xff]
          %v1198 = vld [vmem:[#allocation10 + $0x30] sm:$0xff]
          %v1199 = vld [vmem:[#allocation10 + $0x38] sm:$0xff]
          %v1200 = vld [vmem:[#allocation10 + $0x40] sm:$0xff]
          %v1201 = vld [vmem:[#allocation10 + $0x48] sm:$0xff]
          %v1202 = vld [vmem:[#allocation10 + $0x50] sm:$0xff]
          %v1203 = vld [vmem:[#allocation10 + $0x58] sm:$0xff]
          %v1204 = vld [vmem:[#allocation10 + $0x60] sm:$0xff]
          %v1205 = vld [vmem:[#allocation10 + $0x68] sm:$0xff]
          %v1206 = vld [vmem:[#allocation10 + $0x70] sm:$0xff]
          %v1207 = vld [vmem:[#allocation10 + $0x78] sm:$0xff]
          %v1208 = vld [vmem:[%s8] sm:$0x1]
          %v1210 = vperm.slane %v1208, 0
          %1212 = vmatpush.msra.mxu0 %v1207
          %1213 = vmatpush.msra.mxu0 %v1206
          %1214 = vmatpush.msra.mxu0 %v1205
          %1215 = vmatpush.msra.mxu0 %v1204
          %1216 = vmatpush.msra.mxu0 %v1203
          %1217 = vmatpush.msra.mxu0 %v1202
          %1218 = vmatpush.msra.mxu0 %v1201
          %1219 = vmatpush.msra.mxu0 %v1200
          %1220 = vmatpush.msra.mxu0 %v1199
          %1221 = vmatpush.msra.mxu0 %v1198
          %1222 = vmatpush.msra.mxu0 %v1197
          %1223 = vmatpush.msra.mxu0 %v1196
          %1224 = vmatpush.msra.mxu0 %v1195
          %1225 = vmatpush.msra.mxu0 %v1194
          %1226 = vmatpush.msra.mxu0 %v1193
          %1227 = vmatpush.msra.mxu0 %v1192
          %1228 = vmatmul.f32.gmra.mxu0 %v1189
          %v1229 = vpop.f32.mrf.mxu0
          %v1230 = vadd.f32 %v1210, %v1229
          %1231 = vdwg.mxu0
          %1232 = vst [vmem:[%s410] sm:$0xff] %v1230
          %v1233 = vlaneseq
          %v1234 = vand.u32 %v1233, 127
          %1235 = vmax.xlane.f32.xlu0 %v1230
          %v1236 = vpop.xlane.xlu0 %1235
          %vm1237 = vcmp.eq.f32.partialorder %v1230, %v1236
          %v1238 = vsel %vm1237, %v1234, 128
          %v1239 = vand.u32 %v1238, 65535
          %v1240 = vshra.s32 %v1238, 16
          %v1241 = vcvt.s32.f32 %v1239
          %v1242 = vcvt.s32.f32 %v1240
          %1243 = vmin.xlane.f32.xlu0 %v1242
          %v1244 = vpop.xlane.xlu0 %1243
          %vm1245 = vcmp.eq.f32.partialorder %v1242, %v1244
          %v1246 = vsel %vm1245, %v1241, inf
          %1247 = vmin.xlane.f32.xlu0 %v1246
          %v1248 = vpop.xlane.xlu0 %1247
          %v1249 = vcvt.f32.s32 %v1248
          %v1250 = vcvt.f32.s32 %v1244
          %v1251 = vshll.u32 %v1250, 16
          %v1252 = vadd.s32 %v1251, %v1249
          %vm1253 = vcmp.eq.s32.totalorder %v1234, %v1252
          %v1254 = vsel %vm1253, 1, 0
          %v1255 = vcvt.s32.f32 %v1254
          %v1256 = vld [vmem:[%s9] sm:$0xff]
          %v1257 = vld [vmem:[%s9 + $0x8] sm:$0xff]
          %v1258 = vld [vmem:[%s9 + $0x10] sm:$0xff]
          %v1259 = vld [vmem:[%s9 + $0x18] sm:$0xff]
          %v1260 = vld [vmem:[%s9 + $0x20] sm:$0xff]
          %v1261 = vld [vmem:[%s9 + $0x28] sm:$0xff]
          %v1262 = vld [vmem:[%s9 + $0x30] sm:$0xff]
          %v1263 = vld [vmem:[%s9 + $0x38] sm:$0xff]
          %v1264 = vld [vmem:[%s9 + $0x40] sm:$0xff]
          %v1265 = vld [vmem:[%s9 + $0x48] sm:$0xff]
          %v1266 = vld [vmem:[%s9 + $0x50] sm:$0xff]
          %v1267 = vld [vmem:[%s9 + $0x58] sm:$0xff]
          %v1268 = vld [vmem:[%s9 + $0x60] sm:$0xff]
          %v1269 = vld [vmem:[%s9 + $0x68] sm:$0xff]
          %v1270 = vld [vmem:[%s9 + $0x70] sm:$0xff]
          %v1271 = vld [vmem:[%s9 + $0x78] sm:$0xff]
          %1272 = vmatpush.msra.mxu0 %v1271
          %1273 = vmatpush.msra.mxu0 %v1270
          %1274 = vmatpush.msra.mxu0 %v1269
          %1275 = vmatpush.msra.mxu0 %v1268
          %1276 = vmatpush.msra.mxu0 %v1267
          %1277 = vmatpush.msra.mxu0 %v1266
          %1278 = vmatpush.msra.mxu0 %v1265
          %1279 = vmatpush.msra.mxu0 %v1264
          %1280 = vmatpush.msra.mxu0 %v1263
          %1281 = vmatpush.msra.mxu0 %v1262
          %1282 = vmatpush.msra.mxu0 %v1261
          %1283 = vmatpush.msra.mxu0 %v1260
          %1284 = vmatpush.msra.mxu0 %v1259
          %1285 = vmatpush.msra.mxu0 %v1258
          %1286 = vmatpush.msra.mxu0 %v1257
          %1287 = vmatpush.msra.mxu0 %v1256
          %1288 = vmatmul.f32.gmra.mxu0 %v1255
          %v1289 = vpop.f32.mrf.mxu0
          %v1290 = vadd.f32 0.0, %v1289
          %1291 = vdwg.mxu0
          %1292 = vst [vmem:[#allocation4] sm:$0xff] %v1290
        $region76: #{seq2seq_forward.1} parent=55 // pred_fallthru
          _
        %s1293 = sand.u32 %s257, 1
        %s1294 = scalar_lea.sflag [#allocation9], %s1293
        %s1295 = sand.u32 %s257, 1
        %s1296 = smul.addr %s1295, 8
        %s1297 = scalar_lea.vmem [#allocation12], %s1296
        // Predicated region
        $region81: #{seq2seq_forward.1} parent=55 // pred_check
          %p1298 = pneg %p267
        $region82: #{seq2seq_forward.1} parent=55 // pred_check_branch
          %1300 = sbr.rel (%p1298) target = $region84
        $region83: #{seq2seq_forward.1} parent=55 // pred_region
          %s1301 = sadd.s32 %s34, 4294967289
          %p1302 = scmp.gt.s32.totalorder %s1301, 0
          %s1303 = scalar_select %p1302, %s1301, 0
          %1305 = vsyncadd %s1294, 0
          %s1306 = smul.addr %s1303, 8
          %s1307 = scalar_lea.hbm %s10, %s1306
          %s1309 = sshll.u32 %s1297, 4
          %s1310 = int_to_ptr.vmem [resolvable:$true] %s1309
          %s1311 = sshll.u32 %s1307, 4
          %s1312 = int_to_ptr.hbm [resolvable:$true] %s1311
          %1314 = dma.vmem_to_hbm [thread:$0]  %s1310, 128, %s1312, %s1294
        $region84: #{seq2seq_forward.1} parent=55 // pred_fallthru
          _
      $region56: #{seq2seq_forward.1} parent=5 // pred_fallthru
        _
      %p1315 = scmp.le.s32.totalorder 2, %s29
      // Predicated region
      $region85: #{seq2seq_forward.1} parent=5 // pred_check
        %p1316 = pneg %p1315
      $region86: #{seq2seq_forward.1} parent=5 // pred_check_branch
        %1318 = sbr.rel (%p1316) target = $region88
      $region87: #{seq2seq_forward.1} parent=5 // pred_region
        %s1319 = ssub.s32 %s29, 2
        // Predicated region
        $region89: #{seq2seq_forward.1} parent=87 // pred_check
          %p1320 = pneg %p273
        $region90: #{seq2seq_forward.1} parent=87 // pred_check_branch
          %1322 = sbr.rel (%p1320) target = $region92
        $region91: #{seq2seq_forward.1} parent=87 // pred_region
          %s1323 = sand.u32 %s258, 1
          %s1324 = scalar_lea.sflag [#allocation9], %s1323
          %s1325 = sand.u32 %s258, 1
          %s1326 = smul.addr %s1325, 8
          %s1327 = scalar_lea.vmem [#allocation12], %s1326
          %1329 = dma.done %s1324, 128
        $region92: #{seq2seq_forward.1} parent=87 // pred_fallthru
          _
      $region88: #{seq2seq_forward.1} parent=5 // pred_fallthru
        _
    $region6: #{seq2seq_forward.1} parent=1 // loop_footer
      %s33 = sadd.s32 1, %s29
    $region7: #{seq2seq_forward.1} parent=1 // loop_footer_branch
      %28 = sbr.rel target = $region3
    $region8: #{seq2seq_forward.1} parent=1 // loop_exit
      _
    %1330 = vsyncpa [#allocation8], 1
    %s1331 = scalar_lea.sflag [#allocation8], 1
    %1332 = vsyncpa %s1331, 1
    %1333 = vsyncpa [#allocation11], 1
    %1334 = vsyncpa [#allocation9], 1
    %s1335 = scalar_lea.sflag [#allocation9], 1
    %1336 = vsyncpa %s1335, 1

</llo_original>
